<compile_context>
chip_gen: v7x
topology: tpu7x:2x2x1
jax: 0.10.0
libtpu: 0.0.40
codegen_flags: <defaults>
</compile_context>

<pallas_src>
import functools
import math

import numpy as np
import jax
import jax.numpy as jnp
from jax.experimental import pallas as pl
from jax.experimental.pallas import tpu as pltpu


# ----------------------------------------------------------------------------------
# Fused kernel: conv3x3 -> ReLU -> conv3x3 -> +residual -> ReLU on one batch tile.
#   x_ref    : (C, L) f32   — B zero-padded images, flattened row-major on lanes
#   mask_ref : (1, L) f32   — 1.0 on interior (non-ring, non-tail) lanes
#   w*_ref   : (C, 9C) bf16 — weights, column index = (ky*3 + kx)*C + cin
#   o_ref    : (C, L) f32
# ----------------------------------------------------------------------------------
def _resblock_kernel(x_ref, mask_ref, w1_ref, w2_ref, o_ref, *, wp):
    C, L = x_ref.shape
    # Flat-lane offsets of the 9 taps, t = ky*3 + kx (matches weight column layout).
    offs = [(ky - 1) * wp + (kx - 1) for ky in range(3) for kx in range(3)]

    def conv3x3(x, w):
        # im2col via lane rolls: tap_t[c, q] = x[c, q + off_t].  Roll wraparound only
        # pollutes ring/tail lanes, which are masked (between convs) / sliced (after).
        # Taps stack on sublanes at 8-aligned offsets C*t -> one (C,9C)x(9C,L) MXU
        # matmul per conv with a lane-dense output, bf16 operands, f32 accumulation.
        taps = []
        for off in offs:
            t = x if off == 0 else pltpu.roll(x, (-off) % L, axis=1)
            taps.append(t.astype(jnp.bfloat16))
        col = jnp.concatenate(taps, axis=0)                           # (9C, L) bf16
        return jnp.dot(w, col, preferred_element_type=jnp.float32)    # (C, L) f32

    x = x_ref[...]
    mask = mask_ref[...]

    # conv1 + ReLU, then re-zero the padding ring / tail so conv2 sees zero padding.
    h1 = jnp.maximum(conv3x3(x, w1_ref[...]), 0.0) * mask
    # conv2 (no activation), residual add, final ReLU — all in f32.
    y2 = conv3x3(h1, w2_ref[...])
    o_ref[...] = jnp.maximum(y2 + x, 0.0)


# ----------------------------------------------------------------------------------
# Public wrapper: PyTorch layouts in/out (NCHW activations, OIHW weights).
# ----------------------------------------------------------------------------------
def resblock_forward(x_nchw, w1_oihw, w2_oihw, *, batch_block=None):
    N, C, H, W = x_nchw.shape
    hp, wp = H + 2, W + 2
    P = hp * wp                                  # flattened zero-padded image pixels
    P_pad = ((P + 127) // 128) * 128             # lane-dense per-image footprint

    if batch_block is None:
        # A few images per step amortizes per-step overhead; keep >= 2 grid steps so
        # both TensorCores get work on megacore / v7x parts.
        batch_block = 1 if N <= 2 else min(8, max(1, N // 2))
    B = batch_block
    G = -(-N // B)                               # grid steps
    N_pad = G * B
    L = B * P_pad                                # lanes per grid step (multiple of 128)

    # (N, C, H, W) -> (C, N_pad, hp, wp) zero-padded -> (C, N_pad * P_pad) lanes.
    xt = jnp.transpose(x_nchw.astype(jnp.float32), (1, 0, 2, 3))        # (C, N, H, W)
    xp = jnp.pad(xt, ((0, 0), (0, N_pad - N), (1, 1), (1, 1)))          # (C, Np, hp, wp)
    xf = jnp.pad(xp.reshape(C, N_pad, P), ((0, 0), (0, 0), (0, P_pad - P)))
    xl = xf.reshape(C, N_pad * P_pad)

    # Interior-lane mask (re-zeros the padding ring + tail between the two convs).
    idx = np.arange(P_pad)
    rr, cc = idx // wp, idx % wp
    interior = (idx < P) & (rr >= 1) & (rr <= H) & (cc >= 1) & (cc <= W)
    mask = jnp.asarray(np.tile(interior.astype(np.float32), B)).reshape(1, L)

    # (Cout, Cin, 3, 3) -> (Cout, 9*Cin) bf16, column index = (ky*3 + kx)*Cin + cin.
    def prep_w(w):
        return (jnp.transpose(w.astype(jnp.float32), (0, 2, 3, 1))
                .reshape(C, 9 * C).astype(jnp.bfloat16))

    kernel = functools.partial(_resblock_kernel, wp=wp)
    out = pl.pallas_call(
        kernel,
        out_shape=jax.ShapeDtypeStruct((C, N_pad * P_pad), jnp.float32),
        grid=(G,),
        in_specs=[
            pl.BlockSpec((C, L), lambda g: (0, g)),        # batch tile of padded images
            pl.BlockSpec((1, L), lambda g: (0, 0)),        # interior mask (shared)
            pl.BlockSpec((C, 9 * C), lambda g: (0, 0)),    # conv1 weight (bf16)
            pl.BlockSpec((C, 9 * C), lambda g: (0, 0)),    # conv2 weight (bf16)
        ],
        out_specs=pl.BlockSpec((C, L), lambda g: (0, g)),
        compiler_params=pltpu.CompilerParams(
            dimension_semantics=("parallel",),
            vmem_limit_bytes=32 * 1024 * 1024,             # safe on v5e/v6e/v7x
        ),
    )(xl, mask, prep_w(w1_oihw), prep_w(w2_oihw))

    # Drop tail lanes + padding ring, back to NCHW.
    out = out.reshape(C, N_pad, P_pad)[:, :N, :P].reshape(C, N, hp, wp)
    out = out[:, :, 1:H + 1, 1:W + 1]
    return jnp.transpose(out, (1, 0, 2, 3))


# ----------------------------------------------------------------------------------
# Pure-JAX reference (for a correctness check)
# ----------------------------------------------------------------------------------
def resblock_ref(x_nchw, w1, w2):
    dn = jax.lax.conv_dimension_numbers(x_nchw.shape, w1.shape,
                                        ('NCHW', 'OIHW', 'NCHW'))
    y = jax.lax.conv_general_dilated(x_nchw, w1, (1, 1), 'SAME',
                                     dimension_numbers=dn,
                                     precision=jax.lax.Precision.HIGHEST)
    y = jnp.maximum(y, 0.0)
    y = jax.lax.conv_general_dilated(y, w2, (1, 1), 'SAME',
                                     dimension_numbers=dn,
                                     precision=jax.lax.Precision.HIGHEST)
    return jnp.maximum(y + x_nchw, 0.0)


# ----------------------------------------------------------------------------------
if __name__ == "__main__":
    key = jax.random.PRNGKey(0)
    N, C, H, W = 2, 32, 16, 16          # ResBlock(num_features=32), 16x16, batch 2
    k_x, k_w1, k_w2 = jax.random.split(key, 3)

    x = jax.random.normal(k_x, (N, C, H, W), jnp.float32)
    b = 1.0 / math.sqrt(C * 9)          # PyTorch Conv2d default init bound
    w1 = jax.random.uniform(k_w1, (C, C, 3, 3), jnp.float32, -b, b)
    w2 = jax.random.uniform(k_w2, (C, C, 3, 3), jnp.float32, -b, b)

    fwd = jax.jit(resblock_forward)
    out = jax.block_until_ready(fwd(x, w1, w2))
    assert out.shape == (N, C, H, W)
    assert bool(jnp.all(jnp.isfinite(out)))

    ref = jax.block_until_ready(resblock_ref(x, w1, w2))
    err = float(jnp.max(jnp.abs(out - ref)))
    # bf16 MXU operands with f32 accumulation: expect ~1e-3 .. 1e-2 max abs error.
    assert err < 5e-2, f"max abs error vs reference: {err}"

    print("KERNEL_OK")
</pallas_src>

<mosaic_0001>
module attributes {stable_mosaic.version = 11 : i64} {
  func.func @_resblock_kernel(%arg0: i32, %arg1: memref<32x384xf32, #tpu.memory_space<vmem>>, %arg2: memref<1x384xf32, #tpu.memory_space<vmem>>, %arg3: memref<32x288xbf16, #tpu.memory_space<vmem>>, %arg4: memref<32x288xbf16, #tpu.memory_space<vmem>>, %arg5: memref<32x384xf32, #tpu.memory_space<vmem>>) attributes {dimension_semantics = [#tpu.dimension_semantics<parallel>], iteration_bounds = array<i64: 2>, scalar_prefetch = 0 : i64, scratch_operands = 0 : i64, tpu.core_type = #tpu.core_type<tc>, window_params = [{transform_indices = @transform_0, window_bounds = array<i64: 32, 384>}, {pipeline_mode = #tpu.pipeline_mode<synchronous>, transform_indices = @transform_1, window_bounds = array<i64: 1, 384>}, {pipeline_mode = #tpu.pipeline_mode<synchronous>, transform_indices = @transform_2, window_bounds = array<i64: 32, 288>}, {pipeline_mode = #tpu.pipeline_mode<synchronous>, transform_indices = @transform_3, window_bounds = array<i64: 32, 288>}, {transform_indices = @transform_4, window_bounds = array<i64: 32, 384>}]} {
    %c0 = arith.constant 0 : index
    %c0_0 = arith.constant 0 : index
    %0 = vector.load %arg1[%c0, %c0_0] : memref<32x384xf32, #tpu.memory_space<vmem>>, vector<32x384xf32>
    %c0_1 = arith.constant 0 : index
    %c0_2 = arith.constant 0 : index
    %1 = vector.load %arg2[%c0_1, %c0_2] : memref<1x384xf32, #tpu.memory_space<vmem>>, vector<1x384xf32>
    %c0_3 = arith.constant 0 : index
    %c0_4 = arith.constant 0 : index
    %2 = vector.load %arg3[%c0_3, %c0_4] : memref<32x288xbf16, #tpu.memory_space<vmem>>, vector<32x288xbf16>
    %c19_i32 = arith.constant 19 : i32
    %3 = tpu.dynamic_rotate %0 by %c19_i32 dim 1 : vector<32x384xf32>, i32 -> vector<32x384xf32>
    %4 = arith.truncf %3 : vector<32x384xf32> to vector<32x384xbf16>
    %c18_i32 = arith.constant 18 : i32
    %5 = tpu.dynamic_rotate %0 by %c18_i32 dim 1 : vector<32x384xf32>, i32 -> vector<32x384xf32>
    %6 = arith.truncf %5 : vector<32x384xf32> to vector<32x384xbf16>
    %c17_i32 = arith.constant 17 : i32
    %7 = tpu.dynamic_rotate %0 by %c17_i32 dim 1 : vector<32x384xf32>, i32 -> vector<32x384xf32>
    %8 = arith.truncf %7 : vector<32x384xf32> to vector<32x384xbf16>
    %c1_i32 = arith.constant 1 : i32
    %9 = tpu.dynamic_rotate %0 by %c1_i32 dim 1 : vector<32x384xf32>, i32 -> vector<32x384xf32>
    %10 = arith.truncf %9 : vector<32x384xf32> to vector<32x384xbf16>
    %11 = arith.truncf %0 : vector<32x384xf32> to vector<32x384xbf16>
    %c383_i32 = arith.constant 383 : i32
    %12 = tpu.dynamic_rotate %0 by %c383_i32 dim 1 : vector<32x384xf32>, i32 -> vector<32x384xf32>
    %13 = arith.truncf %12 : vector<32x384xf32> to vector<32x384xbf16>
    %c367_i32 = arith.constant 367 : i32
    %14 = tpu.dynamic_rotate %0 by %c367_i32 dim 1 : vector<32x384xf32>, i32 -> vector<32x384xf32>
    %15 = arith.truncf %14 : vector<32x384xf32> to vector<32x384xbf16>
    %c366_i32 = arith.constant 366 : i32
    %16 = tpu.dynamic_rotate %0 by %c366_i32 dim 1 : vector<32x384xf32>, i32 -> vector<32x384xf32>
    %17 = arith.truncf %16 : vector<32x384xf32> to vector<32x384xbf16>
    %c365_i32 = arith.constant 365 : i32
    %18 = tpu.dynamic_rotate %0 by %c365_i32 dim 1 : vector<32x384xf32>, i32 -> vector<32x384xf32>
    %19 = arith.truncf %18 : vector<32x384xf32> to vector<32x384xbf16>
    %20 = tpu.concatenate %4, %6, %8, %10, %11, %13, %15, %17, %19 in 0 : vector<32x384xbf16>, vector<32x384xbf16>, vector<32x384xbf16>, vector<32x384xbf16>, vector<32x384xbf16>, vector<32x384xbf16>, vector<32x384xbf16>, vector<32x384xbf16>, vector<32x384xbf16> -> vector<288x384xbf16>
    %cst = arith.constant dense<0.000000e+00> : vector<32x384xf32>
    %21 = tpu.matmul %2, %20, %cst {dimension_numbers = #tpu.dot_dimension_numbers<[1], [0], [0], [1], [0, 0, 1, 1], [], []>} : vector<32x288xbf16>, vector<288x384xbf16>, vector<32x384xf32> -> vector<32x384xf32>
    %cst_5 = arith.constant 0.000000e+00 : f32
    %22 = vector.broadcast %cst_5 : f32 to vector<32x384xf32>
    %23 = arith.maximumf %21, %22 : vector<32x384xf32>
    %24 = vector.broadcast %1 : vector<1x384xf32> to vector<32x384xf32>
    %25 = arith.mulf %23, %24 : vector<32x384xf32>
    %c0_6 = arith.constant 0 : index
    %c0_7 = arith.constant 0 : index
    %26 = vector.load %arg4[%c0_6, %c0_7] : memref<32x288xbf16, #tpu.memory_space<vmem>>, vector<32x288xbf16>
    %c19_i32_8 = arith.constant 19 : i32
    %27 = tpu.dynamic_rotate %25 by %c19_i32_8 dim 1 : vector<32x384xf32>, i32 -> vector<32x384xf32>
    %28 = arith.truncf %27 : vector<32x384xf32> to vector<32x384xbf16>
    %c18_i32_9 = arith.constant 18 : i32
    %29 = tpu.dynamic_rotate %25 by %c18_i32_9 dim 1 : vector<32x384xf32>, i32 -> vector<32x384xf32>
    %30 = arith.truncf %29 : vector<32x384xf32> to vector<32x384xbf16>
    %c17_i32_10 = arith.constant 17 : i32
    %31 = tpu.dynamic_rotate %25 by %c17_i32_10 dim 1 : vector<32x384xf32>, i32 -> vector<32x384xf32>
    %32 = arith.truncf %31 : vector<32x384xf32> to vector<32x384xbf16>
    %c1_i32_11 = arith.constant 1 : i32
    %33 = tpu.dynamic_rotate %25 by %c1_i32_11 dim 1 : vector<32x384xf32>, i32 -> vector<32x384xf32>
    %34 = arith.truncf %33 : vector<32x384xf32> to vector<32x384xbf16>
    %35 = arith.truncf %25 : vector<32x384xf32> to vector<32x384xbf16>
    %c383_i32_12 = arith.constant 383 : i32
    %36 = tpu.dynamic_rotate %25 by %c383_i32_12 dim 1 : vector<32x384xf32>, i32 -> vector<32x384xf32>
    %37 = arith.truncf %36 : vector<32x384xf32> to vector<32x384xbf16>
    %c367_i32_13 = arith.constant 367 : i32
    %38 = tpu.dynamic_rotate %25 by %c367_i32_13 dim 1 : vector<32x384xf32>, i32 -> vector<32x384xf32>
    %39 = arith.truncf %38 : vector<32x384xf32> to vector<32x384xbf16>
    %c366_i32_14 = arith.constant 366 : i32
    %40 = tpu.dynamic_rotate %25 by %c366_i32_14 dim 1 : vector<32x384xf32>, i32 -> vector<32x384xf32>
    %41 = arith.truncf %40 : vector<32x384xf32> to vector<32x384xbf16>
    %c365_i32_15 = arith.constant 365 : i32
    %42 = tpu.dynamic_rotate %25 by %c365_i32_15 dim 1 : vector<32x384xf32>, i32 -> vector<32x384xf32>
    %43 = arith.truncf %42 : vector<32x384xf32> to vector<32x384xbf16>
    %44 = tpu.concatenate %28, %30, %32, %34, %35, %37, %39, %41, %43 in 0 : vector<32x384xbf16>, vector<32x384xbf16>, vector<32x384xbf16>, vector<32x384xbf16>, vector<32x384xbf16>, vector<32x384xbf16>, vector<32x384xbf16>, vector<32x384xbf16>, vector<32x384xbf16> -> vector<288x384xbf16>
    %cst_16 = arith.constant dense<0.000000e+00> : vector<32x384xf32>
    %45 = tpu.matmul %26, %44, %cst_16 {dimension_numbers = #tpu.dot_dimension_numbers<[1], [0], [0], [1], [0, 0, 1, 1], [], []>} : vector<32x288xbf16>, vector<288x384xbf16>, vector<32x384xf32> -> vector<32x384xf32>
    %46 = arith.addf %45, %0 : vector<32x384xf32>
    %cst_17 = arith.constant 0.000000e+00 : f32
    %47 = vector.broadcast %cst_17 : f32 to vector<32x384xf32>
    %48 = arith.maximumf %46, %47 : vector<32x384xf32>
    %c0_18 = arith.constant 0 : index
    %c0_19 = arith.constant 0 : index
    %49 = vector.load %arg5[%c0_18, %c0_19] : memref<32x384xf32, #tpu.memory_space<vmem>>, vector<32x384xf32>
    tpu.vector_store %arg5[%c0_18, %c0_19], %48 {strides = array<i32>} : memref<32x384xf32, #tpu.memory_space<vmem>>, vector<32x384xf32>,
    return
  }
  func.func @transform_0(%arg0: i32) -> (i32, i32) {
    %c0_i32 = arith.constant 0 : i32
    %c0_i32_0 = arith.constant 0 : i32
    return %c0_i32, %arg0 : i32, i32
  }
  func.func @transform_1(%arg0: i32) -> (i32, i32) {
    %c0_i32 = arith.constant 0 : i32
    %c0_i32_0 = arith.constant 0 : i32
    %c0_i32_1 = arith.constant 0 : i32
    return %c0_i32, %c0_i32_0 : i32, i32
  }
  func.func @transform_2(%arg0: i32) -> (i32, i32) {
    %c0_i32 = arith.constant 0 : i32
    %c0_i32_0 = arith.constant 0 : i32
    %c0_i32_1 = arith.constant 0 : i32
    return %c0_i32, %c0_i32_0 : i32, i32
  }
  func.func @transform_3(%arg0: i32) -> (i32, i32) {
    %c0_i32 = arith.constant 0 : i32
    %c0_i32_0 = arith.constant 0 : i32
    %c0_i32_1 = arith.constant 0 : i32
    return %c0_i32, %c0_i32_0 : i32, i32
  }
  func.func @transform_4(%arg0: i32) -> (i32, i32) {
    %c0_i32 = arith.constant 0 : i32
    %c0_i32_0 = arith.constant 0 : i32
    return %c0_i32, %arg0 : i32, i32
  }
}

</mosaic_0001>

<llo_original>
// kernel: resblock_forward.1
$region0: #{resblock_forward.1}
  #allocation0 [shape = 'u32[]', space=smem, size = 0x4, offset = 0x4, fixed_abs, tag = 'smem constant byte address 0x4 - core index']
  #allocation1 [shape = 'u32[144,128]{1,0:T(1,128)}', space=vmem, size = 0x12000, scoped, tag = 'internal scratch']
  %s0 = inlined_call_operand.vmem [shape: f32[32,768], index: 0, kind: input, shape index: {}]
  %s1 = inlined_call_operand.vmem [shape: f32[1,384], index: 1, kind: input, shape index: {}]
  %s2 = inlined_call_operand.vmem [shape: bf16[32,288], index: 2, kind: input, shape index: {}]
  %s3 = inlined_call_operand.vmem [shape: bf16[32,288], index: 3, kind: input, shape index: {}]
  %s4 = inlined_call_operand.vmem [shape: f32[32,768], index: 4, kind: output, shape index: {}]
  %s5 = sld [smem:[#allocation0]]
  $region91: #{resblock_forward.1} parent=0
    _
  %s7 = ssub.s32 1, %s5
  %s8 = scalar_select 0, %s7, %s5
  $region1: #{resblock_forward.1} parent=0
    #allocation2 [shape = 'u8[98304]{0}', space=vmem, size = 0x18000, scoped, tag = 'input window, operand 0']
    #allocation3 [shape = 'u8[98304]{0}', space=vmem, size = 0x18000, scoped, tag = 'output window, operand 0']
    loop: start=0, step=1, limit=4
    $region2: #{resblock_forward.1} parent=1 // loop_pre_header
      _
    $region3: #{resblock_forward.1} parent=1 // loop_header
      %s10 = sphi 0, %s14
      %p11 = scmp.ge.s32.totalorder %s10, 4
      %s20 = sphi 0, %s22
      %s23 = sphi 0, %s20
      %s24 = sphi 0, %s23
      %s40 = sphi 0, %s24
      %s44 = sphi 0, %s44
      %s46 = sphi 0, %s44
      %s47 = sphi 0, %s46
      %s61 = sphi 0, %s47
      %s65 = sphi 0, %s65
      %s67 = sphi 0, %s65
      %s68 = sphi 0, %s67
      %s82 = sphi 0, %s68
      %s86 = sphi 0, %s86
      %s88 = sphi 0, %s86
      %s89 = sphi 0, %s88
      %s103 = sphi 0, %s89
      %s109 = sphi 0, %s111
      %s112 = sphi 0, %s109
      %s113 = sphi 0, %s112
      %s129 = sphi 0, %s113
    $region4: #{resblock_forward.1} parent=1 // loop_header_branch
      %13 = sbr.rel (%p11) target = $region8
    $region5: #{resblock_forward.1} parent=1 // loop_body
      %s15 = ssub.s32 %s10, 1
      %s16 = ssub.s32 %s10, 2
      %s17 = sadd.s32 %s10, 1
      %s18 = ssub.s32 %s10, %s17
      %p19 = scmp.eq.s32.totalorder %s18, 0
      %s21 = sadd.s32 %s20, 1
      %s22 = scalar_select %p19, %s20, %s21
      %p25 = pneg %p19
      %p26 = scmp.eq.s32.totalorder %s10, 1
      %p27 = por %p25, %p26
      %p28 = scmp.ne.s32.totalorder %s20, %s23
      %p29 = scmp.eq.s32.totalorder %s10, 0
      %p30 = por %p28, %p29
      %p31 = scmp.ne.s32.totalorder %s20, %s23
      %p32 = scmp.eq.s32.totalorder %s15, 1
      %p33 = por %p31, %p32
      %p34 = scmp.ne.s32.totalorder %s23, %s24
      %p35 = scmp.eq.s32.totalorder %s15, 0
      %p36 = por %p34, %p35
      %p37 = scmp.ne.s32.totalorder %s23, %s24
      %p38 = scmp.eq.s32.totalorder %s16, 1
      %p39 = por %p37, %p38
      %p41 = scmp.ne.s32.totalorder %s24, %s40
      %p42 = scmp.eq.s32.totalorder %s16, 0
      %p43 = por %p41, %p42
      %s45 = sadd.s32 %s44, 1
      %p48 = scmp.eq.s32.totalorder %s10, 1
      %p49 = scmp.ne.s32.totalorder %s44, %s46
      %p50 = scmp.eq.s32.totalorder %s10, 0
      %p51 = por %p49, %p50
      %p52 = scmp.ne.s32.totalorder %s44, %s46
      %p53 = scmp.eq.s32.totalorder %s15, 1
      %p54 = por %p52, %p53
      %p55 = scmp.ne.s32.totalorder %s46, %s47
      %p56 = scmp.eq.s32.totalorder %s15, 0
      %p57 = por %p55, %p56
      %p58 = scmp.ne.s32.totalorder %s46, %s47
      %p59 = scmp.eq.s32.totalorder %s16, 1
      %p60 = por %p58, %p59
      %p62 = scmp.ne.s32.totalorder %s47, %s61
      %p63 = scmp.eq.s32.totalorder %s16, 0
      %p64 = por %p62, %p63
      %s66 = sadd.s32 %s65, 1
      %p69 = scmp.eq.s32.totalorder %s10, 1
      %p70 = scmp.ne.s32.totalorder %s65, %s67
      %p71 = scmp.eq.s32.totalorder %s10, 0
      %p72 = por %p70, %p71
      %p73 = scmp.ne.s32.totalorder %s65, %s67
      %p74 = scmp.eq.s32.totalorder %s15, 1
      %p75 = por %p73, %p74
      %p76 = scmp.ne.s32.totalorder %s67, %s68
      %p77 = scmp.eq.s32.totalorder %s15, 0
      %p78 = por %p76, %p77
      %p79 = scmp.ne.s32.totalorder %s67, %s68
      %p80 = scmp.eq.s32.totalorder %s16, 1
      %p81 = por %p79, %p80
      %p83 = scmp.ne.s32.totalorder %s68, %s82
      %p84 = scmp.eq.s32.totalorder %s16, 0
      %p85 = por %p83, %p84
      %s87 = sadd.s32 %s86, 1
      %p90 = scmp.eq.s32.totalorder %s10, 1
      %p91 = scmp.ne.s32.totalorder %s86, %s88
      %p92 = scmp.eq.s32.totalorder %s10, 0
      %p93 = por %p91, %p92
      %p94 = scmp.ne.s32.totalorder %s86, %s88
      %p95 = scmp.eq.s32.totalorder %s15, 1
      %p96 = por %p94, %p95
      %p97 = scmp.ne.s32.totalorder %s88, %s89
      %p98 = scmp.eq.s32.totalorder %s15, 0
      %p99 = por %p97, %p98
      %p100 = scmp.ne.s32.totalorder %s88, %s89
      %p101 = scmp.eq.s32.totalorder %s16, 1
      %p102 = por %p100, %p101
      %p104 = scmp.ne.s32.totalorder %s89, %s103
      %p105 = scmp.eq.s32.totalorder %s16, 0
      %p106 = por %p104, %p105
      %s107 = ssub.s32 %s10, %s17
      %p108 = scmp.eq.s32.totalorder %s107, 0
      %s110 = sadd.s32 %s109, 1
      %s111 = scalar_select %p108, %s109, %s110
      %p114 = pneg %p108
      %p115 = scmp.eq.s32.totalorder %s10, 1
      %p116 = por %p114, %p115
      %p117 = scmp.ne.s32.totalorder %s109, %s112
      %p118 = scmp.eq.s32.totalorder %s10, 0
      %p119 = por %p117, %p118
      %p120 = scmp.ne.s32.totalorder %s109, %s112
      %p121 = scmp.eq.s32.totalorder %s15, 1
      %p122 = por %p120, %p121
      %p123 = scmp.ne.s32.totalorder %s112, %s113
      %p124 = scmp.eq.s32.totalorder %s15, 0
      %p125 = por %p123, %p124
      %p126 = scmp.ne.s32.totalorder %s112, %s113
      %p127 = scmp.eq.s32.totalorder %s16, 1
      %p128 = por %p126, %p127
      %p130 = scmp.ne.s32.totalorder %s113, %s129
      %p131 = scmp.eq.s32.totalorder %s16, 0
      %p132 = por %p130, %p131
      %p133 = scmp.le.s32.totalorder 1, %s10
      %p134 = scmp.lt.s32.totalorder %s10, 3
      %p135 = pnand %p133, %p134
      %p136 = pneg %p135
      // Predicated region
      $region9: #{resblock_forward.1} parent=5 // pred_check
        _
      $region10: #{resblock_forward.1} parent=5 // pred_check_branch
        %138 = sbr.rel (%p135) target = $region12
      $region11: #{resblock_forward.1} parent=5 // pred_region
        %s139 = ssub.s32 %s10, 1
        // Predicated region
        $region13: #{resblock_forward.1} parent=11 // pred_check
          %p140 = pneg %p57
        $region14: #{resblock_forward.1} parent=11 // pred_check_branch
          %142 = sbr.rel (%p140) target = $region16
        $region15: #{resblock_forward.1} parent=11 // pred_region
          _
        $region16: #{resblock_forward.1} parent=11 // pred_fallthru
          _
        // Predicated region
        $region17: #{resblock_forward.1} parent=11 // pred_check
          %p143 = pneg %p78
        $region18: #{resblock_forward.1} parent=11 // pred_check_branch
          %145 = sbr.rel (%p143) target = $region20
        $region19: #{resblock_forward.1} parent=11 // pred_region
          _
        $region20: #{resblock_forward.1} parent=11 // pred_fallthru
          _
        // Predicated region
        $region21: #{resblock_forward.1} parent=11 // pred_check
          %p146 = pneg %p99
        $region22: #{resblock_forward.1} parent=11 // pred_check_branch
          %148 = sbr.rel (%p146) target = $region24
        $region23: #{resblock_forward.1} parent=11 // pred_region
          _
        $region24: #{resblock_forward.1} parent=11 // pred_fallthru
          _
      $region12: #{resblock_forward.1} parent=5 // pred_fallthru
        _
      %p149 = scmp.lt.s32.totalorder %s10, 2
      // Predicated region
      $region25: #{resblock_forward.1} parent=5 // pred_check
        %p150 = pneg %p149
      $region26: #{resblock_forward.1} parent=5 // pred_check_branch
        %152 = sbr.rel (%p150) target = $region28
      $region27: #{resblock_forward.1} parent=5 // pred_region
        // Predicated region
        $region29: #{resblock_forward.1} parent=27 // pred_check
          %p153 = pneg %p30
        $region30: #{resblock_forward.1} parent=27 // pred_check_branch
          %155 = sbr.rel (%p153) target = $region32
        $region31: #{resblock_forward.1} parent=27 // pred_region
          %s156 = sand.u32 %s20, 1
          %s157 = sand.u32 %s20, 1
          %s158 = smul.addr %s157, 96
          %s159 = scalar_lea.vmem [#allocation2], %s158
          %s160 = smul.u32 3, %s10
          %s161 = smul.addr %s160, 8
          %s162 = scalar_lea.vmem %s0, %s161
          // Predicated region
          $region33: #{resblock_forward.1} parent=31 // pred_check
            _
          $region34: #{resblock_forward.1} parent=31 // pred_check_branch
            %164 = sbr.rel (0) target = $region36
          $region35: #{resblock_forward.1} parent=31 // pred_region
            // Predicated region
            $region37: #{resblock_forward.1} parent=35 // pred_check
              _
            $region38: #{resblock_forward.1} parent=35 // pred_check_branch
              %166 = sbr.rel (0) target = $region40
            $region39: #{resblock_forward.1} parent=35 // pred_region
              loop: start=0, step=1, limit=1
              $region41: #{resblock_forward.1} parent=39 // loop_pre_header
                _
              $region42: #{resblock_forward.1} parent=39 // loop_header
                %s168 = sphi 0, %s172
                %p169 = scmp.ge.s32.totalorder %s168, 1
                %s173 = sphi %s162, %s162
                %s174 = sphi %s159, %s159
              $region43: #{resblock_forward.1} parent=39 // loop_header_branch
                %171 = sbr.rel (%p169) target = $region47
              $region44: #{resblock_forward.1} parent=39 // loop_body
                %v175 = vld [vmem:[%s173] sm:$0xff]
                %176 = vst [vmem:[%s174] sm:$0xff] %v175
                %v177 = vld [vmem:[%s173 + $0x8] sm:$0xff]
                %178 = vst [vmem:[%s174 + $0x8] sm:$0xff] %v177
                %v179 = vld [vmem:[%s173 + $0x10] sm:$0xff]
                %180 = vst [vmem:[%s174 + $0x10] sm:$0xff] %v179
                %v181 = vld [vmem:[%s173 + $0x30] sm:$0xff]
                %182 = vst [vmem:[%s174 + $0x18] sm:$0xff] %v181
                %v183 = vld [vmem:[%s173 + $0x38] sm:$0xff]
                %184 = vst [vmem:[%s174 + $0x20] sm:$0xff] %v183
                %v185 = vld [vmem:[%s173 + $0x40] sm:$0xff]
                %186 = vst [vmem:[%s174 + $0x28] sm:$0xff] %v185
                %v187 = vld [vmem:[%s173 + $0x60] sm:$0xff]
                %188 = vst [vmem:[%s174 + $0x30] sm:$0xff] %v187
                %v189 = vld [vmem:[%s173 + $0x68] sm:$0xff]
                %190 = vst [vmem:[%s174 + $0x38] sm:$0xff] %v189
                %v191 = vld [vmem:[%s173 + $0x70] sm:$0xff]
                %192 = vst [vmem:[%s174 + $0x40] sm:$0xff] %v191
                %v193 = vld [vmem:[%s173 + $0x90] sm:$0xff]
                %194 = vst [vmem:[%s174 + $0x48] sm:$0xff] %v193
                %v195 = vld [vmem:[%s173 + $0x98] sm:$0xff]
                %196 = vst [vmem:[%s174 + $0x50] sm:$0xff] %v195
                %v197 = vld [vmem:[%s173 + $0xa0] sm:$0xff]
                %198 = vst [vmem:[%s174 + $0x58] sm:$0xff] %v197
              $region45: #{resblock_forward.1} parent=39 // loop_footer
                %s172 = sadd.s32 1, %s168
              $region46: #{resblock_forward.1} parent=39 // loop_footer_branch
                %167 = sbr.rel target = $region42
              $region47: #{resblock_forward.1} parent=39 // loop_exit
                _
            $region40: #{resblock_forward.1} parent=35 // pred_fallthru
              _
            // Predicated region
            $region48: #{resblock_forward.1} parent=35 // pred_check
              _
            $region49: #{resblock_forward.1} parent=35 // pred_check_branch
              %200 = sbr.rel target = $region51
            $region50: #{resblock_forward.1} parent=35 // pred_region
              _
            $region51: #{resblock_forward.1} parent=35 // pred_fallthru
              _
          $region36: #{resblock_forward.1} parent=31 // pred_fallthru
            _
          %201 = vnop
        $region32: #{resblock_forward.1} parent=27 // pred_fallthru
          _
      $region28: #{resblock_forward.1} parent=5 // pred_fallthru
        _
      %p202 = scmp.le.s32.totalorder 1, %s10
      %p203 = scmp.lt.s32.totalorder %s10, 3
      %p204 = pnand %p202, %p203
      %p205 = pneg %p204
      // Predicated region
      $region52: #{resblock_forward.1} parent=5 // pred_check
        _
      $region53: #{resblock_forward.1} parent=5 // pred_check_branch
        %207 = sbr.rel (%p204) target = $region55
      $region54: #{resblock_forward.1} parent=5 // pred_region
        %s208 = ssub.s32 %s10, 1
        %s209 = sand.u32 %s23, 1
        %s210 = sand.u32 %s23, 1
        %s211 = smul.addr %s210, 96
        %s212 = scalar_lea.vmem [#allocation2], %s211
        // Predicated region
        $region56: #{resblock_forward.1} parent=54 // pred_check
          %p213 = pneg %p36
        $region57: #{resblock_forward.1} parent=54 // pred_check_branch
          %215 = sbr.rel (%p213) target = $region59
        $region58: #{resblock_forward.1} parent=54 // pred_region
          _
        $region59: #{resblock_forward.1} parent=54 // pred_fallthru
          _
        %s216 = sand.u32 %s23, 1
        %s217 = sand.u32 %s23, 1
        %s218 = smul.addr %s217, 96
        %s219 = scalar_lea.vmem [#allocation2], %s218
        %p220 = pneg %p36
        %p221 = pneg %p33
        %p222 = pneg %p57
        %p223 = pneg %p54
        %p224 = pneg %p78
        %p225 = pneg %p75
        %p226 = pneg %p99
        %p227 = pneg %p96
        %p228 = pneg %p125
        %p229 = pneg %p122
        %s230 = sand.u32 %s112, 1
        %s231 = sand.u32 %s112, 1
        %s232 = smul.addr %s231, 96
        %s233 = scalar_lea.vmem [#allocation3], %s232
        %s234 = smul.u32 3, %s15
        %s235 = smul.u32 3, %s15
        %v237 = vld [vmem:[%s212] sm:$0xff]
        %v238 = vld [vmem:[%s212 + $0x8] sm:$0xff]
        %v239 = vld [vmem:[%s212 + $0x10] sm:$0xff]
        %v240 = vld [vmem:[%s212 + $0x18] sm:$0xff]
        %v241 = vld [vmem:[%s212 + $0x20] sm:$0xff]
        %v242 = vld [vmem:[%s212 + $0x28] sm:$0xff]
        %v243 = vld [vmem:[%s212 + $0x30] sm:$0xff]
        %v244 = vld [vmem:[%s212 + $0x38] sm:$0xff]
        %v245 = vld [vmem:[%s212 + $0x40] sm:$0xff]
        %v246 = vld [vmem:[%s212 + $0x48] sm:$0xff]
        %v247 = vld [vmem:[%s212 + $0x50] sm:$0xff]
        %v248 = vld [vmem:[%s212 + $0x58] sm:$0xff]
        %v249 = vld [vmem:[%s1] sm:$0x7]
        %v250 = vld [vmem:[%s2] sm:$0xff]
        %v251 = vld [vmem:[%s2 + $0x8] sm:$0xf]
        %v252 = vld [vmem:[%s2 + $0xc] sm:$0xff]
        %v253 = vld [vmem:[%s2 + $0x14] sm:$0xf]
        %v254 = vld [vmem:[%s2 + $0x18] sm:$0xff]
        %v255 = vld [vmem:[%s2 + $0x20] sm:$0xf]
        %v256 = vld [vmem:[%s2 + $0x24] sm:$0xff]
        %v257 = vld [vmem:[%s2 + $0x2c] sm:$0xf]
        %258 = vrot.lane.b32.xlu0 %v237, 19
        %v259 = vpop.permute.xlu0 %258
        %260 = vrot.lane.b32.xlu0 %v240, 19
        %v261 = vpop.permute.xlu0 %260
        %262 = vrot.lane.b32.xlu0 %v243, 19
        %v263 = vpop.permute.xlu0 %262
        %264 = vrot.lane.b32.xlu0 %v246, 19
        %v265 = vpop.permute.xlu0 %264
        %266 = vrot.lane.b32.xlu0 %v238, 19
        %v267 = vpop.permute.xlu0 %266
        %268 = vrot.lane.b32.xlu0 %v241, 19
        %v269 = vpop.permute.xlu0 %268
        %270 = vrot.lane.b32.xlu0 %v244, 19
        %v271 = vpop.permute.xlu0 %270
        %272 = vrot.lane.b32.xlu0 %v247, 19
        %v273 = vpop.permute.xlu0 %272
        %274 = vrot.lane.b32.xlu0 %v239, 19
        %v275 = vpop.permute.xlu0 %274
        %276 = vrot.lane.b32.xlu0 %v242, 19
        %v277 = vpop.permute.xlu0 %276
        %278 = vrot.lane.b32.xlu0 %v245, 19
        %v279 = vpop.permute.xlu0 %278
        %280 = vrot.lane.b32.xlu0 %v248, 19
        %v281 = vpop.permute.xlu0 %280
        %v282 = vlaneseq
        %v283 = vand.u32 %v282, 127
        %vm284 = vcmp.lt.s32.totalorder %v283, 19
        %v285 = vsel %vm284, %v267, %v275
        %v286 = vsel %vm284, %v269, %v277
        %v287 = vsel %vm284, %v271, %v279
        %v288 = vsel %vm284, %v273, %v281
        %v289 = vsel %vm284, %v259, %v267
        %v290 = vsel %vm284, %v261, %v269
        %v291 = vsel %vm284, %v263, %v271
        %v292 = vsel %vm284, %v265, %v273
        %v293 = vsel %vm284, %v275, %v259
        %v294 = vsel %vm284, %v277, %v261
        %v295 = vsel %vm284, %v279, %v263
        %v296 = vsel %vm284, %v281, %v265
        %v297 = vpack.c.bf16 %v294, %v293
        %v298 = vpack.c.bf16 %v290, %v289
        %v299 = vpack.c.bf16 %v286, %v285
        %v300 = vpack.c.bf16 %v296, %v295
        %v301 = vpack.c.bf16 %v292, %v291
        %v302 = vpack.c.bf16 %v288, %v287
        %303 = vrot.lane.b32.xlu0 %v237, 18
        %v304 = vpop.permute.xlu0 %303
        %305 = vrot.lane.b32.xlu0 %v240, 18
        %v306 = vpop.permute.xlu0 %305
        %307 = vrot.lane.b32.xlu0 %v243, 18
        %v308 = vpop.permute.xlu0 %307
        %309 = vrot.lane.b32.xlu0 %v246, 18
        %v310 = vpop.permute.xlu0 %309
        %311 = vrot.lane.b32.xlu0 %v238, 18
        %v312 = vpop.permute.xlu0 %311
        %313 = vrot.lane.b32.xlu0 %v241, 18
        %v314 = vpop.permute.xlu0 %313
        %315 = vrot.lane.b32.xlu0 %v244, 18
        %v316 = vpop.permute.xlu0 %315
        %317 = vrot.lane.b32.xlu0 %v247, 18
        %v318 = vpop.permute.xlu0 %317
        %319 = vrot.lane.b32.xlu0 %v239, 18
        %v320 = vpop.permute.xlu0 %319
        %321 = vrot.lane.b32.xlu0 %v242, 18
        %v322 = vpop.permute.xlu0 %321
        %323 = vrot.lane.b32.xlu0 %v245, 18
        %v324 = vpop.permute.xlu0 %323
        %325 = vrot.lane.b32.xlu0 %v248, 18
        %v326 = vpop.permute.xlu0 %325
        %vm327 = vcmp.lt.s32.totalorder %v283, 18
        %v328 = vsel %vm327, %v312, %v320
        %v329 = vsel %vm327, %v314, %v322
        %v330 = vsel %vm327, %v316, %v324
        %v331 = vsel %vm327, %v318, %v326
        %v332 = vsel %vm327, %v304, %v312
        %v333 = vsel %vm327, %v306, %v314
        %v334 = vsel %vm327, %v308, %v316
        %v335 = vsel %vm327, %v310, %v318
        %v336 = vsel %vm327, %v320, %v304
        %v337 = vsel %vm327, %v322, %v306
        %v338 = vsel %vm327, %v324, %v308
        %v339 = vsel %vm327, %v326, %v310
        %v340 = vpack.c.bf16 %v337, %v336
        %v341 = vpack.c.bf16 %v333, %v332
        %v342 = vpack.c.bf16 %v329, %v328
        %v343 = vpack.c.bf16 %v339, %v338
        %v344 = vpack.c.bf16 %v335, %v334
        %v345 = vpack.c.bf16 %v331, %v330
        %346 = vrot.lane.b32.xlu0 %v237, 17
        %v347 = vpop.permute.xlu0 %346
        %348 = vrot.lane.b32.xlu0 %v240, 17
        %v349 = vpop.permute.xlu0 %348
        %350 = vrot.lane.b32.xlu0 %v243, 17
        %v351 = vpop.permute.xlu0 %350
        %352 = vrot.lane.b32.xlu0 %v246, 17
        %v353 = vpop.permute.xlu0 %352
        %354 = vrot.lane.b32.xlu0 %v238, 17
        %v355 = vpop.permute.xlu0 %354
        %356 = vrot.lane.b32.xlu0 %v241, 17
        %v357 = vpop.permute.xlu0 %356
        %358 = vrot.lane.b32.xlu0 %v244, 17
        %v359 = vpop.permute.xlu0 %358
        %360 = vrot.lane.b32.xlu0 %v247, 17
        %v361 = vpop.permute.xlu0 %360
        %362 = vrot.lane.b32.xlu0 %v239, 17
        %v363 = vpop.permute.xlu0 %362
        %364 = vrot.lane.b32.xlu0 %v242, 17
        %v365 = vpop.permute.xlu0 %364
        %366 = vrot.lane.b32.xlu0 %v245, 17
        %v367 = vpop.permute.xlu0 %366
        %368 = vrot.lane.b32.xlu0 %v248, 17
        %v369 = vpop.permute.xlu0 %368
        %vm370 = vcmp.lt.s32.totalorder %v283, 17
        %v371 = vsel %vm370, %v355, %v363
        %v372 = vsel %vm370, %v357, %v365
        %v373 = vsel %vm370, %v359, %v367
        %v374 = vsel %vm370, %v361, %v369
        %v375 = vsel %vm370, %v347, %v355
        %v376 = vsel %vm370, %v349, %v357
        %v377 = vsel %vm370, %v351, %v359
        %v378 = vsel %vm370, %v353, %v361
        %v379 = vsel %vm370, %v363, %v347
        %v380 = vsel %vm370, %v365, %v349
        %v381 = vsel %vm370, %v367, %v351
        %v382 = vsel %vm370, %v369, %v353
        %v383 = vpack.c.bf16 %v380, %v379
        %v384 = vpack.c.bf16 %v376, %v375
        %v385 = vpack.c.bf16 %v372, %v371
        %v386 = vpack.c.bf16 %v382, %v381
        %v387 = vpack.c.bf16 %v378, %v377
        %v388 = vpack.c.bf16 %v374, %v373
        %389 = vrot.lane.b32.xlu0 %v237, 1
        %v390 = vpop.permute.xlu0 %389
        %391 = vrot.lane.b32.xlu0 %v240, 1
        %v392 = vpop.permute.xlu0 %391
        %393 = vrot.lane.b32.xlu0 %v243, 1
        %v394 = vpop.permute.xlu0 %393
        %395 = vrot.lane.b32.xlu0 %v246, 1
        %v396 = vpop.permute.xlu0 %395
        %397 = vrot.lane.b32.xlu0 %v238, 1
        %v398 = vpop.permute.xlu0 %397
        %399 = vrot.lane.b32.xlu0 %v241, 1
        %v400 = vpop.permute.xlu0 %399
        %401 = vrot.lane.b32.xlu0 %v244, 1
        %v402 = vpop.permute.xlu0 %401
        %403 = vrot.lane.b32.xlu0 %v247, 1
        %v404 = vpop.permute.xlu0 %403
        %405 = vrot.lane.b32.xlu0 %v239, 1
        %v406 = vpop.permute.xlu0 %405
        %407 = vrot.lane.b32.xlu0 %v242, 1
        %v408 = vpop.permute.xlu0 %407
        %409 = vrot.lane.b32.xlu0 %v245, 1
        %v410 = vpop.permute.xlu0 %409
        %411 = vrot.lane.b32.xlu0 %v248, 1
        %v412 = vpop.permute.xlu0 %411
        %vm413 = vcmp.lt.s32.totalorder %v283, 1
        %v414 = vsel %vm413, %v398, %v406
        %v415 = vsel %vm413, %v400, %v408
        %v416 = vsel %vm413, %v402, %v410
        %v417 = vsel %vm413, %v404, %v412
        %v418 = vsel %vm413, %v390, %v398
        %v419 = vsel %vm413, %v392, %v400
        %v420 = vsel %vm413, %v394, %v402
        %v421 = vsel %vm413, %v396, %v404
        %v422 = vsel %vm413, %v406, %v390
        %v423 = vsel %vm413, %v408, %v392
        %v424 = vsel %vm413, %v410, %v394
        %v425 = vsel %vm413, %v412, %v396
        %v426 = vpack.c.bf16 %v423, %v422
        %v427 = vpack.c.bf16 %v419, %v418
        %v428 = vpack.c.bf16 %v415, %v414
        %v429 = vpack.c.bf16 %v425, %v424
        %v430 = vpack.c.bf16 %v421, %v420
        %v431 = vpack.c.bf16 %v417, %v416
        %v432 = vpack.c.bf16 %v240, %v237
        %v433 = vpack.c.bf16 %v241, %v238
        %v434 = vpack.c.bf16 %v242, %v239
        %v435 = vpack.c.bf16 %v246, %v243
        %v436 = vpack.c.bf16 %v247, %v244
        %v437 = vpack.c.bf16 %v248, %v245
        %438 = vrot.lane.b32.xlu0 %v237, 127
        %v439 = vpop.permute.xlu0 %438
        %440 = vrot.lane.b32.xlu0 %v240, 127
        %v441 = vpop.permute.xlu0 %440
        %442 = vrot.lane.b32.xlu0 %v243, 127
        %v443 = vpop.permute.xlu0 %442
        %444 = vrot.lane.b32.xlu0 %v246, 127
        %v445 = vpop.permute.xlu0 %444
        %446 = vrot.lane.b32.xlu0 %v238, 127
        %v447 = vpop.permute.xlu0 %446
        %448 = vrot.lane.b32.xlu0 %v241, 127
        %v449 = vpop.permute.xlu0 %448
        %450 = vrot.lane.b32.xlu0 %v244, 127
        %v451 = vpop.permute.xlu0 %450
        %452 = vrot.lane.b32.xlu0 %v247, 127
        %v453 = vpop.permute.xlu0 %452
        %454 = vrot.lane.b32.xlu0 %v239, 127
        %v455 = vpop.permute.xlu0 %454
        %456 = vrot.lane.b32.xlu0 %v242, 127
        %v457 = vpop.permute.xlu0 %456
        %458 = vrot.lane.b32.xlu0 %v245, 127
        %v459 = vpop.permute.xlu0 %458
        %460 = vrot.lane.b32.xlu0 %v248, 127
        %v461 = vpop.permute.xlu0 %460
        %vm462 = vcmp.lt.s32.totalorder %v283, 127
        %v463 = vsel %vm462, %v447, %v455
        %v464 = vsel %vm462, %v449, %v457
        %v465 = vsel %vm462, %v451, %v459
        %v466 = vsel %vm462, %v453, %v461
        %v467 = vsel %vm462, %v439, %v447
        %v468 = vsel %vm462, %v441, %v449
        %v469 = vsel %vm462, %v443, %v451
        %v470 = vsel %vm462, %v445, %v453
        %v471 = vsel %vm462, %v455, %v439
        %v472 = vsel %vm462, %v457, %v441
        %v473 = vsel %vm462, %v459, %v443
        %v474 = vsel %vm462, %v461, %v445
        %v475 = vpack.c.bf16 %v468, %v467
        %v476 = vpack.c.bf16 %v464, %v463
        %v477 = vpack.c.bf16 %v472, %v471
        %v478 = vpack.c.bf16 %v470, %v469
        %v479 = vpack.c.bf16 %v466, %v465
        %v480 = vpack.c.bf16 %v474, %v473
        %481 = vrot.lane.b32.xlu0 %v237, 111
        %v482 = vpop.permute.xlu0 %481
        %483 = vrot.lane.b32.xlu0 %v240, 111
        %v484 = vpop.permute.xlu0 %483
        %485 = vrot.lane.b32.xlu0 %v243, 111
        %v486 = vpop.permute.xlu0 %485
        %487 = vrot.lane.b32.xlu0 %v246, 111
        %v488 = vpop.permute.xlu0 %487
        %489 = vrot.lane.b32.xlu0 %v238, 111
        %v490 = vpop.permute.xlu0 %489
        %491 = vrot.lane.b32.xlu0 %v241, 111
        %v492 = vpop.permute.xlu0 %491
        %493 = vrot.lane.b32.xlu0 %v244, 111
        %v494 = vpop.permute.xlu0 %493
        %495 = vrot.lane.b32.xlu0 %v247, 111
        %v496 = vpop.permute.xlu0 %495
        %497 = vrot.lane.b32.xlu0 %v239, 111
        %v498 = vpop.permute.xlu0 %497
        %499 = vrot.lane.b32.xlu0 %v242, 111
        %v500 = vpop.permute.xlu0 %499
        %501 = vrot.lane.b32.xlu0 %v245, 111
        %v502 = vpop.permute.xlu0 %501
        %503 = vrot.lane.b32.xlu0 %v248, 111
        %v504 = vpop.permute.xlu0 %503
        %vm505 = vcmp.lt.s32.totalorder %v283, 111
        %v506 = vsel %vm505, %v490, %v498
        %v507 = vsel %vm505, %v492, %v500
        %v508 = vsel %vm505, %v494, %v502
        %v509 = vsel %vm505, %v496, %v504
        %v510 = vsel %vm505, %v482, %v490
        %v511 = vsel %vm505, %v484, %v492
        %v512 = vsel %vm505, %v486, %v494
        %v513 = vsel %vm505, %v488, %v496
        %v514 = vsel %vm505, %v498, %v482
        %v515 = vsel %vm505, %v500, %v484
        %v516 = vsel %vm505, %v502, %v486
        %v517 = vsel %vm505, %v504, %v488
        %v518 = vpack.c.bf16 %v511, %v510
        %v519 = vpack.c.bf16 %v507, %v506
        %v520 = vpack.c.bf16 %v515, %v514
        %v521 = vpack.c.bf16 %v513, %v512
        %v522 = vpack.c.bf16 %v509, %v508
        %v523 = vpack.c.bf16 %v517, %v516
        %524 = vrot.lane.b32.xlu0 %v237, 110
        %v525 = vpop.permute.xlu0 %524
        %526 = vrot.lane.b32.xlu0 %v240, 110
        %v527 = vpop.permute.xlu0 %526
        %528 = vrot.lane.b32.xlu0 %v243, 110
        %v529 = vpop.permute.xlu0 %528
        %530 = vrot.lane.b32.xlu0 %v246, 110
        %v531 = vpop.permute.xlu0 %530
        %532 = vrot.lane.b32.xlu0 %v238, 110
        %v533 = vpop.permute.xlu0 %532
        %534 = vrot.lane.b32.xlu0 %v241, 110
        %v535 = vpop.permute.xlu0 %534
        %536 = vrot.lane.b32.xlu0 %v244, 110
        %v537 = vpop.permute.xlu0 %536
        %538 = vrot.lane.b32.xlu0 %v247, 110
        %v539 = vpop.permute.xlu0 %538
        %540 = vrot.lane.b32.xlu0 %v239, 110
        %v541 = vpop.permute.xlu0 %540
        %542 = vrot.lane.b32.xlu0 %v242, 110
        %v543 = vpop.permute.xlu0 %542
        %544 = vrot.lane.b32.xlu0 %v245, 110
        %v545 = vpop.permute.xlu0 %544
        %546 = vrot.lane.b32.xlu0 %v248, 110
        %v547 = vpop.permute.xlu0 %546
        %vm548 = vcmp.lt.s32.totalorder %v283, 110
        %v549 = vsel %vm548, %v533, %v541
        %v550 = vsel %vm548, %v535, %v543
        %v551 = vsel %vm548, %v537, %v545
        %v552 = vsel %vm548, %v539, %v547
        %v553 = vsel %vm548, %v525, %v533
        %v554 = vsel %vm548, %v527, %v535
        %v555 = vsel %vm548, %v529, %v537
        %v556 = vsel %vm548, %v531, %v539
        %v557 = vsel %vm548, %v541, %v525
        %v558 = vsel %vm548, %v543, %v527
        %v559 = vsel %vm548, %v545, %v529
        %v560 = vsel %vm548, %v547, %v531
        %v561 = vpack.c.bf16 %v554, %v553
        %v562 = vpack.c.bf16 %v550, %v549
        %v563 = vpack.c.bf16 %v558, %v557
        %v564 = vpack.c.bf16 %v556, %v555
        %v565 = vpack.c.bf16 %v552, %v551
        %v566 = vpack.c.bf16 %v560, %v559
        %567 = vrot.lane.b32.xlu0 %v237, 109
        %v568 = vpop.permute.xlu0 %567
        %569 = vrot.lane.b32.xlu0 %v240, 109
        %v570 = vpop.permute.xlu0 %569
        %571 = vrot.lane.b32.xlu0 %v243, 109
        %v572 = vpop.permute.xlu0 %571
        %573 = vrot.lane.b32.xlu0 %v246, 109
        %v574 = vpop.permute.xlu0 %573
        %575 = vrot.lane.b32.xlu0 %v238, 109
        %v576 = vpop.permute.xlu0 %575
        %577 = vrot.lane.b32.xlu0 %v241, 109
        %v578 = vpop.permute.xlu0 %577
        %579 = vrot.lane.b32.xlu0 %v244, 109
        %v580 = vpop.permute.xlu0 %579
        %581 = vrot.lane.b32.xlu0 %v247, 109
        %v582 = vpop.permute.xlu0 %581
        %583 = vrot.lane.b32.xlu0 %v239, 109
        %v584 = vpop.permute.xlu0 %583
        %585 = vrot.lane.b32.xlu0 %v242, 109
        %v586 = vpop.permute.xlu0 %585
        %587 = vrot.lane.b32.xlu0 %v245, 109
        %v588 = vpop.permute.xlu0 %587
        %589 = vrot.lane.b32.xlu0 %v248, 109
        %v590 = vpop.permute.xlu0 %589
        %vm591 = vcmp.lt.s32.totalorder %v283, 109
        %v592 = vsel %vm591, %v576, %v584
        %v593 = vsel %vm591, %v578, %v586
        %v594 = vsel %vm591, %v580, %v588
        %v595 = vsel %vm591, %v582, %v590
        %v596 = vsel %vm591, %v568, %v576
        %v597 = vsel %vm591, %v570, %v578
        %v598 = vsel %vm591, %v572, %v580
        %v599 = vsel %vm591, %v574, %v582
        %v600 = vsel %vm591, %v584, %v568
        %v601 = vsel %vm591, %v586, %v570
        %v602 = vsel %vm591, %v588, %v572
        %v603 = vsel %vm591, %v590, %v574
        %v604 = vpack.c.bf16 %v597, %v596
        %v605 = vpack.c.bf16 %v593, %v592
        %v606 = vpack.c.bf16 %v601, %v600
        %v607 = vpack.c.bf16 %v599, %v598
        %v608 = vpack.c.bf16 %v595, %v594
        %v609 = vpack.c.bf16 %v603, %v602
        %v618 = vunpack.c.l.b16 %v250
        %v619 = vunpack.c.h.b16 %v250
        %v620 = vunpack.c.l.b16 %v251
        %v621 = vunpack.c.l.b16 %v252
        %v622 = vunpack.c.h.b16 %v252
        %v623 = vunpack.c.l.b16 %v253
        %v624 = vunpack.c.l.b16 %v254
        %v625 = vunpack.c.h.b16 %v254
        %v626 = vunpack.c.l.b16 %v255
        %v627 = vunpack.c.l.b16 %v256
        %v628 = vunpack.c.h.b16 %v256
        %v629 = vunpack.c.l.b16 %v257
        %v630 = vpack.c.b16 %v621, %v618
        %v631 = vpack.c.b16 %v622, %v619
        %v632 = vpack.c.b16 %v623, %v620
        %v633 = vpack.c.b16 %v627, %v624
        %v634 = vpack.c.b16 %v628, %v625
        %v635 = vpack.c.b16 %v629, %v626
        %vm640 = vcmask 261120
        %v642 = vsel %vm640, %v632, 0
        %v645 = vsel %vm640, %v635, 0
        %647 = vmatprep.subr.bf16.mxu0 %v298
        %648 = vmatpush1.bf16.msra.mxu0 %v297
        %649 = vmatprep.subr.bf16.mxu0 %v301
        %650 = vmatpush1.bf16.msra.mxu0 %v300
        %651 = vmatprep.subr.bf16.mxu0 %v341
        %652 = vmatpush1.bf16.msra.mxu0 %v340
        %653 = vmatprep.subr.bf16.mxu0 %v344
        %654 = vmatpush1.bf16.msra.mxu0 %v343
        %655 = vmatprep.subr.bf16.mxu0 %v384
        %656 = vmatpush1.bf16.msra.mxu0 %v383
        %657 = vmatprep.subr.bf16.mxu0 %v387
        %658 = vmatpush1.bf16.msra.mxu0 %v386
        %659 = vmatprep.subr.bf16.mxu0 %v427
        %660 = vmatpush1.bf16.msra.mxu0 %v426
        %661 = vmatprep.subr.bf16.mxu0 %v430
        %662 = vmatpush1.bf16.msra.mxu0 %v429
        %663 = vmatprep.subr.bf16.mxu0 %v433
        %664 = vmatpush1.bf16.msra.mxu0 %v432
        %665 = vmatprep.subr.bf16.mxu0 %v436
        %666 = vmatpush1.bf16.msra.mxu0 %v435
        %667 = vmatprep.subr.bf16.mxu0 %v476
        %668 = vmatpush1.bf16.msra.mxu0 %v475
        %669 = vmatprep.subr.bf16.mxu0 %v479
        %670 = vmatpush1.bf16.msra.mxu0 %v478
        %671 = vmatprep.subr.bf16.mxu0 %v519
        %672 = vmatpush1.bf16.msra.mxu0 %v518
        %673 = vmatprep.subr.bf16.mxu0 %v522
        %674 = vmatpush1.bf16.msra.mxu0 %v521
        %675 = vmatprep.subr.bf16.mxu0 %v562
        %676 = vmatpush1.bf16.msra.mxu0 %v561
        %677 = vmatprep.subr.bf16.mxu0 %v565
        %678 = vmatpush1.bf16.msra.mxu0 %v564
        %679 = vmatprep.mubr.bf16.mxu0 %v631
        %680 = vmatmul.mubr.bf16.gmra.mrb[0].mxu0 %v630
        %v681 = vpop.f32.mrb[0].mxu0
        %v682 = vadd.f32 0.0, %v681
        %v683 = vpop.f32.mrb[0].mxu0
        %v684 = vadd.f32 0.0, %v683
        %v685 = vpop.f32.mrb[0].mxu0
        %v686 = vadd.f32 0.0, %v685
        %v687 = vpop.f32.mrb[0].mxu0
        %v688 = vadd.f32 0.0, %v687
        %689 = vmatprep.mubr.bf16.mxu0 %v634
        %690 = vmatmul.mubr.bf16.gmra.mrb[0].mxu0 %v633
        %v691 = vpop.f32.mrb[0].mxu0
        %v692 = vadd.f32 0.0, %v691
        %v693 = vpop.f32.mrb[0].mxu0
        %v694 = vadd.f32 0.0, %v693
        %v695 = vpop.f32.mrb[0].mxu0
        %v696 = vadd.f32 0.0, %v695
        %v697 = vpop.f32.mrb[0].mxu0
        %v698 = vadd.f32 0.0, %v697
        %699 = vdwg.mxu0
        %700 = vmatprep.subr.bf16.mxu0 %v605
        %701 = vmatpush1.bf16.msra.mxu0 %v604
        %702 = vmatprep.subr.bf16.mxu0 %v608
        %703 = vmatpush1.bf16.msra.mxu0 %v607
        %704 = vmatprep.subr.bf16.mxu0 0
        %705 = vmatpush1.bf16.msra.mxu0 0
        %706 = vmatprep.subr.bf16.mxu0 0
        %707 = vmatpush1.bf16.msra.mxu0 0
        %708 = vmatprep.subr.bf16.mxu0 0
        %709 = vmatpush1.bf16.msra.mxu0 0
        %710 = vmatprep.subr.bf16.mxu0 0
        %711 = vmatpush1.bf16.msra.mxu0 0
        %712 = vmatprep.subr.bf16.mxu0 0
        %713 = vmatpush1.bf16.msra.mxu0 0
        %714 = vmatprep.subr.bf16.mxu0 0
        %715 = vmatpush1.bf16.msra.mxu0 0
        %716 = vmatprep.subr.bf16.mxu0 0
        %717 = vmatpush1.bf16.msra.mxu0 0
        %718 = vmatprep.subr.bf16.mxu0 0
        %719 = vmatpush1.bf16.msra.mxu0 0
        %720 = vmatprep.subr.bf16.mxu0 0
        %721 = vmatpush1.bf16.msra.mxu0 0
        %722 = vmatprep.subr.bf16.mxu0 0
        %723 = vmatpush1.bf16.msra.mxu0 0
        %724 = vmatprep.subr.bf16.mxu0 0
        %725 = vmatpush1.bf16.msra.mxu0 0
        %726 = vmatprep.subr.bf16.mxu0 0
        %727 = vmatpush1.bf16.msra.mxu0 0
        %728 = vmatprep.subr.bf16.mxu0 0
        %729 = vmatpush1.bf16.msra.mxu0 0
        %730 = vmatprep.subr.bf16.mxu0 0
        %731 = vmatpush1.bf16.msra.mxu0 0
        %732 = vmatprep.mubr.bf16.mxu0 0
        %733 = vmatmul.mubr.bf16.gmra.mrb[0].mxu0 %v642
        %v734 = vpop.f32.mrb[0].mxu0
        %v735 = vadd.f32 %v682, %v734
        %v736 = vpop.f32.mrb[0].mxu0
        %v737 = vadd.f32 %v684, %v736
        %v738 = vpop.f32.mrb[0].mxu0
        %v739 = vadd.f32 %v686, %v738
        %v740 = vpop.f32.mrb[0].mxu0
        %v741 = vadd.f32 %v688, %v740
        %742 = vmatprep.mubr.bf16.mxu0 0
        %743 = vmatmul.mubr.bf16.gmra.mrb[0].mxu0 %v645
        %v744 = vpop.f32.mrb[0].mxu0
        %v745 = vadd.f32 %v692, %v744
        %v746 = vpop.f32.mrb[0].mxu0
        %v747 = vadd.f32 %v694, %v746
        %v748 = vpop.f32.mrb[0].mxu0
        %v749 = vadd.f32 %v696, %v748
        %v750 = vpop.f32.mrb[0].mxu0
        %v751 = vadd.f32 %v698, %v750
        %752 = vdwg.mxu0
        %753 = vmatprep.subr.bf16.mxu0 0
        %754 = vmatpush1.bf16.msra.mxu0 %v299
        %755 = vmatprep.subr.bf16.mxu0 0
        %756 = vmatpush1.bf16.msra.mxu0 %v302
        %757 = vmatprep.subr.bf16.mxu0 0
        %758 = vmatpush1.bf16.msra.mxu0 %v342
        %759 = vmatprep.subr.bf16.mxu0 0
        %760 = vmatpush1.bf16.msra.mxu0 %v345
        %761 = vmatprep.subr.bf16.mxu0 0
        %762 = vmatpush1.bf16.msra.mxu0 %v385
        %763 = vmatprep.subr.bf16.mxu0 0
        %764 = vmatpush1.bf16.msra.mxu0 %v388
        %765 = vmatprep.subr.bf16.mxu0 0
        %766 = vmatpush1.bf16.msra.mxu0 %v428
        %767 = vmatprep.subr.bf16.mxu0 0
        %768 = vmatpush1.bf16.msra.mxu0 %v431
        %769 = vmatprep.subr.bf16.mxu0 0
        %770 = vmatpush1.bf16.msra.mxu0 %v434
        %771 = vmatprep.subr.bf16.mxu0 0
        %772 = vmatpush1.bf16.msra.mxu0 %v437
        %773 = vmatprep.subr.bf16.mxu0 0
        %774 = vmatpush1.bf16.msra.mxu0 %v477
        %775 = vmatprep.subr.bf16.mxu0 0
        %776 = vmatpush1.bf16.msra.mxu0 %v480
        %777 = vmatprep.subr.bf16.mxu0 0
        %778 = vmatpush1.bf16.msra.mxu0 %v520
        %779 = vmatprep.subr.bf16.mxu0 0
        %780 = vmatpush1.bf16.msra.mxu0 %v523
        %781 = vmatprep.subr.bf16.mxu0 0
        %782 = vmatpush1.bf16.msra.mxu0 %v563
        %783 = vmatprep.subr.bf16.mxu0 0
        %784 = vmatpush1.bf16.msra.mxu0 %v566
        %785 = vmatprep.mubr.bf16.mxu0 %v631
        %786 = vmatmul.mubr.bf16.gmra.mrb[0].mxu0 %v630
        %v787 = vpop.f32.mrb[0].mxu0
        %v788 = vadd.f32 0.0, %v787
        %v789 = vpop.f32.mrb[0].mxu0
        %v790 = vpop.f32.mrb[0].mxu0
        %v791 = vadd.f32 0.0, %v790
        %v792 = vpop.f32.mrb[0].mxu0
        %793 = vmatprep.mubr.bf16.mxu0 %v634
        %794 = vmatmul.mubr.bf16.gmra.mrb[0].mxu0 %v633
        %v795 = vpop.f32.mrb[0].mxu0
        %v796 = vadd.f32 0.0, %v795
        %v797 = vpop.f32.mrb[0].mxu0
        %v798 = vpop.f32.mrb[0].mxu0
        %v799 = vadd.f32 0.0, %v798
        %v800 = vpop.f32.mrb[0].mxu0
        %801 = vdwg.mxu0
        %802 = vmatprep.subr.bf16.mxu0 0
        %803 = vmatpush1.bf16.msra.mxu0 %v606
        %804 = vmatprep.subr.bf16.mxu0 0
        %805 = vmatpush1.bf16.msra.mxu0 %v609
        %806 = vmatprep.subr.bf16.mxu0 0
        %807 = vmatpush1.bf16.msra.mxu0 0
        %808 = vmatprep.subr.bf16.mxu0 0
        %809 = vmatpush1.bf16.msra.mxu0 0
        %810 = vmatprep.subr.bf16.mxu0 0
        %811 = vmatpush1.bf16.msra.mxu0 0
        %812 = vmatprep.subr.bf16.mxu0 0
        %813 = vmatpush1.bf16.msra.mxu0 0
        %814 = vmatprep.subr.bf16.mxu0 0
        %815 = vmatpush1.bf16.msra.mxu0 0
        %816 = vmatprep.subr.bf16.mxu0 0
        %817 = vmatpush1.bf16.msra.mxu0 0
        %818 = vmatprep.subr.bf16.mxu0 0
        %819 = vmatpush1.bf16.msra.mxu0 0
        %820 = vmatprep.subr.bf16.mxu0 0
        %821 = vmatpush1.bf16.msra.mxu0 0
        %822 = vmatprep.subr.bf16.mxu0 0
        %823 = vmatpush1.bf16.msra.mxu0 0
        %824 = vmatprep.subr.bf16.mxu0 0
        %825 = vmatpush1.bf16.msra.mxu0 0
        %826 = vmatprep.subr.bf16.mxu0 0
        %827 = vmatpush1.bf16.msra.mxu0 0
        %828 = vmatprep.subr.bf16.mxu0 0
        %829 = vmatpush1.bf16.msra.mxu0 0
        %830 = vmatprep.subr.bf16.mxu0 0
        %831 = vmatpush1.bf16.msra.mxu0 0
        %832 = vmatprep.subr.bf16.mxu0 0
        %833 = vmatpush1.bf16.msra.mxu0 0
        %834 = vmatprep.mubr.bf16.mxu0 0
        %835 = vmatmul.mubr.bf16.gmra.mrb[0].mxu0 %v642
        %v836 = vpop.f32.mrb[0].mxu0
        %v837 = vadd.f32 %v788, %v836
        %v838 = vpop.f32.mrb[0].mxu0
        %v839 = vpop.f32.mrb[0].mxu0
        %v840 = vadd.f32 %v791, %v839
        %v841 = vpop.f32.mrb[0].mxu0
        %842 = vmatprep.mubr.bf16.mxu0 0
        %843 = vmatmul.mubr.bf16.gmra.mrb[0].mxu0 %v645
        %v844 = vpop.f32.mrb[0].mxu0
        %v845 = vadd.f32 %v796, %v844
        %v846 = vpop.f32.mrb[0].mxu0
        %v847 = vpop.f32.mrb[0].mxu0
        %v848 = vadd.f32 %v799, %v847
        %v849 = vpop.f32.mrb[0].mxu0
        %850 = vdwg.mxu0
        %v851 = vmax.f32 %v735, 0.0
        %v852 = vmax.f32 %v737, 0.0
        %v853 = vmax.f32 %v837, 0.0
        %v854 = vmax.f32 %v739, 0.0
        %v855 = vmax.f32 %v741, 0.0
        %v856 = vmax.f32 %v840, 0.0
        %v857 = vmax.f32 %v745, 0.0
        %v858 = vmax.f32 %v747, 0.0
        %v859 = vmax.f32 %v845, 0.0
        %v860 = vmax.f32 %v749, 0.0
        %v861 = vmax.f32 %v751, 0.0
        %v862 = vmax.f32 %v848, 0.0
        %v864 = vlaneseq
        %v865 = vshrl.u32 %v864, 7
        %v866 = vsub.s32 0, %v865
        %v867 = vrot.slane %v249, %v866
        %v868 = vlaneseq
        %v869 = vshrl.u32 %v868, 7
        %v870 = vsub.s32 1, %v869
        %v871 = vrot.slane %v249, %v870
        %v872 = vlaneseq
        %v873 = vshrl.u32 %v872, 7
        %v874 = vsub.s32 2, %v873
        %v875 = vrot.slane %v249, %v874
        %v879 = vmul.f32 %v851, %v867
        %v880 = vmul.f32 %v852, %v871
        %v881 = vmul.f32 %v853, %v875
        %v882 = vmul.f32 %v854, %v867
        %v883 = vmul.f32 %v855, %v871
        %v884 = vmul.f32 %v856, %v875
        %v885 = vmul.f32 %v857, %v867
        %v886 = vmul.f32 %v858, %v871
        %v887 = vmul.f32 %v859, %v875
        %v888 = vmul.f32 %v860, %v867
        %v889 = vmul.f32 %v861, %v871
        %v890 = vmul.f32 %v862, %v875
        %v891 = vld [vmem:[%s3] sm:$0xff]
        %v892 = vld [vmem:[%s3 + $0x8] sm:$0xf]
        %v893 = vld [vmem:[%s3 + $0xc] sm:$0xff]
        %v894 = vld [vmem:[%s3 + $0x14] sm:$0xf]
        %v895 = vld [vmem:[%s3 + $0x18] sm:$0xff]
        %v896 = vld [vmem:[%s3 + $0x20] sm:$0xf]
        %v897 = vld [vmem:[%s3 + $0x24] sm:$0xff]
        %v898 = vld [vmem:[%s3 + $0x2c] sm:$0xf]
        %899 = vrot.lane.b32.xlu0 %v879, 19
        %v900 = vpop.permute.xlu0 %899
        %901 = vrot.lane.b32.xlu0 %v882, 19
        %v902 = vpop.permute.xlu0 %901
        %903 = vrot.lane.b32.xlu0 %v885, 19
        %v904 = vpop.permute.xlu0 %903
        %905 = vrot.lane.b32.xlu0 %v888, 19
        %v906 = vpop.permute.xlu0 %905
        %907 = vrot.lane.b32.xlu0 %v880, 19
        %v908 = vpop.permute.xlu0 %907
        %909 = vrot.lane.b32.xlu0 %v883, 19
        %v910 = vpop.permute.xlu0 %909
        %911 = vrot.lane.b32.xlu0 %v886, 19
        %v912 = vpop.permute.xlu0 %911
        %913 = vrot.lane.b32.xlu0 %v889, 19
        %v914 = vpop.permute.xlu0 %913
        %915 = vrot.lane.b32.xlu0 %v881, 19
        %v916 = vpop.permute.xlu0 %915
        %917 = vrot.lane.b32.xlu0 %v884, 19
        %v918 = vpop.permute.xlu0 %917
        %919 = vrot.lane.b32.xlu0 %v887, 19
        %v920 = vpop.permute.xlu0 %919
        %921 = vrot.lane.b32.xlu0 %v890, 19
        %v922 = vpop.permute.xlu0 %921
        %v923 = vsel %vm284, %v908, %v916
        %v924 = vsel %vm284, %v910, %v918
        %v925 = vsel %vm284, %v912, %v920
        %v926 = vsel %vm284, %v914, %v922
        %v927 = vsel %vm284, %v900, %v908
        %v928 = vsel %vm284, %v902, %v910
        %v929 = vsel %vm284, %v904, %v912
        %v930 = vsel %vm284, %v906, %v914
        %v931 = vsel %vm284, %v916, %v900
        %v932 = vsel %vm284, %v918, %v902
        %v933 = vsel %vm284, %v920, %v904
        %v934 = vsel %vm284, %v922, %v906
        %v935 = vpack.c.bf16 %v932, %v931
        %v936 = vpack.c.bf16 %v928, %v927
        %v937 = vpack.c.bf16 %v924, %v923
        %v938 = vpack.c.bf16 %v934, %v933
        %v939 = vpack.c.bf16 %v930, %v929
        %v940 = vpack.c.bf16 %v926, %v925
        %941 = vrot.lane.b32.xlu0 %v879, 18
        %v942 = vpop.permute.xlu0 %941
        %943 = vrot.lane.b32.xlu0 %v882, 18
        %v944 = vpop.permute.xlu0 %943
        %945 = vrot.lane.b32.xlu0 %v885, 18
        %v946 = vpop.permute.xlu0 %945
        %947 = vrot.lane.b32.xlu0 %v888, 18
        %v948 = vpop.permute.xlu0 %947
        %949 = vrot.lane.b32.xlu0 %v880, 18
        %v950 = vpop.permute.xlu0 %949
        %951 = vrot.lane.b32.xlu0 %v883, 18
        %v952 = vpop.permute.xlu0 %951
        %953 = vrot.lane.b32.xlu0 %v886, 18
        %v954 = vpop.permute.xlu0 %953
        %955 = vrot.lane.b32.xlu0 %v889, 18
        %v956 = vpop.permute.xlu0 %955
        %957 = vrot.lane.b32.xlu0 %v881, 18
        %v958 = vpop.permute.xlu0 %957
        %959 = vrot.lane.b32.xlu0 %v884, 18
        %v960 = vpop.permute.xlu0 %959
        %961 = vrot.lane.b32.xlu0 %v887, 18
        %v962 = vpop.permute.xlu0 %961
        %963 = vrot.lane.b32.xlu0 %v890, 18
        %v964 = vpop.permute.xlu0 %963
        %v965 = vsel %vm327, %v950, %v958
        %v966 = vsel %vm327, %v952, %v960
        %v967 = vsel %vm327, %v954, %v962
        %v968 = vsel %vm327, %v956, %v964
        %v969 = vsel %vm327, %v942, %v950
        %v970 = vsel %vm327, %v944, %v952
        %v971 = vsel %vm327, %v946, %v954
        %v972 = vsel %vm327, %v948, %v956
        %v973 = vsel %vm327, %v958, %v942
        %v974 = vsel %vm327, %v960, %v944
        %v975 = vsel %vm327, %v962, %v946
        %v976 = vsel %vm327, %v964, %v948
        %v977 = vpack.c.bf16 %v974, %v973
        %v978 = vpack.c.bf16 %v970, %v969
        %v979 = vpack.c.bf16 %v966, %v965
        %v980 = vpack.c.bf16 %v976, %v975
        %v981 = vpack.c.bf16 %v972, %v971
        %v982 = vpack.c.bf16 %v968, %v967
        %983 = vrot.lane.b32.xlu0 %v879, 17
        %v984 = vpop.permute.xlu0 %983
        %985 = vrot.lane.b32.xlu0 %v882, 17
        %v986 = vpop.permute.xlu0 %985
        %987 = vrot.lane.b32.xlu0 %v885, 17
        %v988 = vpop.permute.xlu0 %987
        %989 = vrot.lane.b32.xlu0 %v888, 17
        %v990 = vpop.permute.xlu0 %989
        %991 = vrot.lane.b32.xlu0 %v880, 17
        %v992 = vpop.permute.xlu0 %991
        %993 = vrot.lane.b32.xlu0 %v883, 17
        %v994 = vpop.permute.xlu0 %993
        %995 = vrot.lane.b32.xlu0 %v886, 17
        %v996 = vpop.permute.xlu0 %995
        %997 = vrot.lane.b32.xlu0 %v889, 17
        %v998 = vpop.permute.xlu0 %997
        %999 = vrot.lane.b32.xlu0 %v881, 17
        %v1000 = vpop.permute.xlu0 %999
        %1001 = vrot.lane.b32.xlu0 %v884, 17
        %v1002 = vpop.permute.xlu0 %1001
        %1003 = vrot.lane.b32.xlu0 %v887, 17
        %v1004 = vpop.permute.xlu0 %1003
        %1005 = vrot.lane.b32.xlu0 %v890, 17
        %v1006 = vpop.permute.xlu0 %1005
        %v1007 = vsel %vm370, %v992, %v1000
        %v1008 = vsel %vm370, %v994, %v1002
        %v1009 = vsel %vm370, %v996, %v1004
        %v1010 = vsel %vm370, %v998, %v1006
        %v1011 = vsel %vm370, %v984, %v992
        %v1012 = vsel %vm370, %v986, %v994
        %v1013 = vsel %vm370, %v988, %v996
        %v1014 = vsel %vm370, %v990, %v998
        %v1015 = vsel %vm370, %v1000, %v984
        %v1016 = vsel %vm370, %v1002, %v986
        %v1017 = vsel %vm370, %v1004, %v988
        %v1018 = vsel %vm370, %v1006, %v990
        %v1019 = vpack.c.bf16 %v1016, %v1015
        %v1020 = vpack.c.bf16 %v1012, %v1011
        %v1021 = vpack.c.bf16 %v1008, %v1007
        %v1022 = vpack.c.bf16 %v1018, %v1017
        %v1023 = vpack.c.bf16 %v1014, %v1013
        %v1024 = vpack.c.bf16 %v1010, %v1009
        %1025 = vrot.lane.b32.xlu0 %v879, 1
        %v1026 = vpop.permute.xlu0 %1025
        %1027 = vrot.lane.b32.xlu0 %v882, 1
        %v1028 = vpop.permute.xlu0 %1027
        %1029 = vrot.lane.b32.xlu0 %v885, 1
        %v1030 = vpop.permute.xlu0 %1029
        %1031 = vrot.lane.b32.xlu0 %v888, 1
        %v1032 = vpop.permute.xlu0 %1031
        %1033 = vrot.lane.b32.xlu0 %v880, 1
        %v1034 = vpop.permute.xlu0 %1033
        %1035 = vrot.lane.b32.xlu0 %v883, 1
        %v1036 = vpop.permute.xlu0 %1035
        %1037 = vrot.lane.b32.xlu0 %v886, 1
        %v1038 = vpop.permute.xlu0 %1037
        %1039 = vrot.lane.b32.xlu0 %v889, 1
        %v1040 = vpop.permute.xlu0 %1039
        %1041 = vrot.lane.b32.xlu0 %v881, 1
        %v1042 = vpop.permute.xlu0 %1041
        %1043 = vrot.lane.b32.xlu0 %v884, 1
        %v1044 = vpop.permute.xlu0 %1043
        %1045 = vrot.lane.b32.xlu0 %v887, 1
        %v1046 = vpop.permute.xlu0 %1045
        %1047 = vrot.lane.b32.xlu0 %v890, 1
        %v1048 = vpop.permute.xlu0 %1047
        %v1049 = vsel %vm413, %v1034, %v1042
        %v1050 = vsel %vm413, %v1036, %v1044
        %v1051 = vsel %vm413, %v1038, %v1046
        %v1052 = vsel %vm413, %v1040, %v1048
        %v1053 = vsel %vm413, %v1026, %v1034
        %v1054 = vsel %vm413, %v1028, %v1036
        %v1055 = vsel %vm413, %v1030, %v1038
        %v1056 = vsel %vm413, %v1032, %v1040
        %v1057 = vsel %vm413, %v1042, %v1026
        %v1058 = vsel %vm413, %v1044, %v1028
        %v1059 = vsel %vm413, %v1046, %v1030
        %v1060 = vsel %vm413, %v1048, %v1032
        %v1061 = vpack.c.bf16 %v1058, %v1057
        %v1062 = vpack.c.bf16 %v1054, %v1053
        %v1063 = vpack.c.bf16 %v1050, %v1049
        %v1064 = vpack.c.bf16 %v1060, %v1059
        %v1065 = vpack.c.bf16 %v1056, %v1055
        %v1066 = vpack.c.bf16 %v1052, %v1051
        %v1067 = vpack.c.bf16 %v882, %v879
        %v1068 = vpack.c.bf16 %v883, %v880
        %v1069 = vpack.c.bf16 %v884, %v881
        %v1070 = vpack.c.bf16 %v888, %v885
        %v1071 = vpack.c.bf16 %v889, %v886
        %v1072 = vpack.c.bf16 %v890, %v887
        %1073 = vrot.lane.b32.xlu0 %v879, 127
        %v1074 = vpop.permute.xlu0 %1073
        %1075 = vrot.lane.b32.xlu0 %v882, 127
        %v1076 = vpop.permute.xlu0 %1075
        %1077 = vrot.lane.b32.xlu0 %v885, 127
        %v1078 = vpop.permute.xlu0 %1077
        %1079 = vrot.lane.b32.xlu0 %v888, 127
        %v1080 = vpop.permute.xlu0 %1079
        %1081 = vrot.lane.b32.xlu0 %v880, 127
        %v1082 = vpop.permute.xlu0 %1081
        %1083 = vrot.lane.b32.xlu0 %v883, 127
        %v1084 = vpop.permute.xlu0 %1083
        %1085 = vrot.lane.b32.xlu0 %v886, 127
        %v1086 = vpop.permute.xlu0 %1085
        %1087 = vrot.lane.b32.xlu0 %v889, 127
        %v1088 = vpop.permute.xlu0 %1087
        %1089 = vrot.lane.b32.xlu0 %v881, 127
        %v1090 = vpop.permute.xlu0 %1089
        %1091 = vrot.lane.b32.xlu0 %v884, 127
        %v1092 = vpop.permute.xlu0 %1091
        %1093 = vrot.lane.b32.xlu0 %v887, 127
        %v1094 = vpop.permute.xlu0 %1093
        %1095 = vrot.lane.b32.xlu0 %v890, 127
        %v1096 = vpop.permute.xlu0 %1095
        %v1097 = vsel %vm462, %v1082, %v1090
        %v1098 = vsel %vm462, %v1084, %v1092
        %v1099 = vsel %vm462, %v1086, %v1094
        %v1100 = vsel %vm462, %v1088, %v1096
        %v1101 = vsel %vm462, %v1074, %v1082
        %v1102 = vsel %vm462, %v1076, %v1084
        %v1103 = vsel %vm462, %v1078, %v1086
        %v1104 = vsel %vm462, %v1080, %v1088
        %v1105 = vsel %vm462, %v1090, %v1074
        %v1106 = vsel %vm462, %v1092, %v1076
        %v1107 = vsel %vm462, %v1094, %v1078
        %v1108 = vsel %vm462, %v1096, %v1080
        %v1109 = vpack.c.bf16 %v1102, %v1101
        %v1110 = vpack.c.bf16 %v1098, %v1097
        %v1111 = vpack.c.bf16 %v1106, %v1105
        %v1112 = vpack.c.bf16 %v1104, %v1103
        %v1113 = vpack.c.bf16 %v1100, %v1099
        %v1114 = vpack.c.bf16 %v1108, %v1107
        %1115 = vrot.lane.b32.xlu0 %v879, 111
        %v1116 = vpop.permute.xlu0 %1115
        %1117 = vrot.lane.b32.xlu0 %v882, 111
        %v1118 = vpop.permute.xlu0 %1117
        %1119 = vrot.lane.b32.xlu0 %v885, 111
        %v1120 = vpop.permute.xlu0 %1119
        %1121 = vrot.lane.b32.xlu0 %v888, 111
        %v1122 = vpop.permute.xlu0 %1121
        %1123 = vrot.lane.b32.xlu0 %v880, 111
        %v1124 = vpop.permute.xlu0 %1123
        %1125 = vrot.lane.b32.xlu0 %v883, 111
        %v1126 = vpop.permute.xlu0 %1125
        %1127 = vrot.lane.b32.xlu0 %v886, 111
        %v1128 = vpop.permute.xlu0 %1127
        %1129 = vrot.lane.b32.xlu0 %v889, 111
        %v1130 = vpop.permute.xlu0 %1129
        %1131 = vrot.lane.b32.xlu0 %v881, 111
        %v1132 = vpop.permute.xlu0 %1131
        %1133 = vrot.lane.b32.xlu0 %v884, 111
        %v1134 = vpop.permute.xlu0 %1133
        %1135 = vrot.lane.b32.xlu0 %v887, 111
        %v1136 = vpop.permute.xlu0 %1135
        %1137 = vrot.lane.b32.xlu0 %v890, 111
        %v1138 = vpop.permute.xlu0 %1137
        %v1139 = vsel %vm505, %v1124, %v1132
        %v1140 = vsel %vm505, %v1126, %v1134
        %v1141 = vsel %vm505, %v1128, %v1136
        %v1142 = vsel %vm505, %v1130, %v1138
        %v1143 = vsel %vm505, %v1116, %v1124
        %v1144 = vsel %vm505, %v1118, %v1126
        %v1145 = vsel %vm505, %v1120, %v1128
        %v1146 = vsel %vm505, %v1122, %v1130
        %v1147 = vsel %vm505, %v1132, %v1116
        %v1148 = vsel %vm505, %v1134, %v1118
        %v1149 = vsel %vm505, %v1136, %v1120
        %v1150 = vsel %vm505, %v1138, %v1122
        %v1151 = vpack.c.bf16 %v1144, %v1143
        %v1152 = vpack.c.bf16 %v1140, %v1139
        %v1153 = vpack.c.bf16 %v1148, %v1147
        %v1154 = vpack.c.bf16 %v1146, %v1145
        %v1155 = vpack.c.bf16 %v1142, %v1141
        %v1156 = vpack.c.bf16 %v1150, %v1149
        %1157 = vrot.lane.b32.xlu0 %v879, 110
        %v1158 = vpop.permute.xlu0 %1157
        %1159 = vrot.lane.b32.xlu0 %v882, 110
        %v1160 = vpop.permute.xlu0 %1159
        %1161 = vrot.lane.b32.xlu0 %v885, 110
        %v1162 = vpop.permute.xlu0 %1161
        %1163 = vrot.lane.b32.xlu0 %v888, 110
        %v1164 = vpop.permute.xlu0 %1163
        %1165 = vrot.lane.b32.xlu0 %v880, 110
        %v1166 = vpop.permute.xlu0 %1165
        %1167 = vrot.lane.b32.xlu0 %v883, 110
        %v1168 = vpop.permute.xlu0 %1167
        %1169 = vrot.lane.b32.xlu0 %v886, 110
        %v1170 = vpop.permute.xlu0 %1169
        %1171 = vrot.lane.b32.xlu0 %v889, 110
        %v1172 = vpop.permute.xlu0 %1171
        %1173 = vrot.lane.b32.xlu0 %v881, 110
        %v1174 = vpop.permute.xlu0 %1173
        %1175 = vrot.lane.b32.xlu0 %v884, 110
        %v1176 = vpop.permute.xlu0 %1175
        %1177 = vrot.lane.b32.xlu0 %v887, 110
        %v1178 = vpop.permute.xlu0 %1177
        %1179 = vrot.lane.b32.xlu0 %v890, 110
        %v1180 = vpop.permute.xlu0 %1179
        %v1181 = vsel %vm548, %v1166, %v1174
        %v1182 = vsel %vm548, %v1168, %v1176
        %v1183 = vsel %vm548, %v1170, %v1178
        %v1184 = vsel %vm548, %v1172, %v1180
        %v1185 = vsel %vm548, %v1158, %v1166
        %v1186 = vsel %vm548, %v1160, %v1168
        %v1187 = vsel %vm548, %v1162, %v1170
        %v1188 = vsel %vm548, %v1164, %v1172
        %v1189 = vsel %vm548, %v1174, %v1158
        %v1190 = vsel %vm548, %v1176, %v1160
        %v1191 = vsel %vm548, %v1178, %v1162
        %v1192 = vsel %vm548, %v1180, %v1164
        %v1193 = vpack.c.bf16 %v1186, %v1185
        %v1194 = vpack.c.bf16 %v1182, %v1181
        %v1195 = vpack.c.bf16 %v1190, %v1189
        %v1196 = vpack.c.bf16 %v1188, %v1187
        %v1197 = vpack.c.bf16 %v1184, %v1183
        %v1198 = vpack.c.bf16 %v1192, %v1191
        %1199 = vrot.lane.b32.xlu0 %v879, 109
        %v1200 = vpop.permute.xlu0 %1199
        %1201 = vrot.lane.b32.xlu0 %v882, 109
        %v1202 = vpop.permute.xlu0 %1201
        %1203 = vrot.lane.b32.xlu0 %v885, 109
        %v1204 = vpop.permute.xlu0 %1203
        %1205 = vrot.lane.b32.xlu0 %v888, 109
        %v1206 = vpop.permute.xlu0 %1205
        %1207 = vrot.lane.b32.xlu0 %v880, 109
        %v1208 = vpop.permute.xlu0 %1207
        %1209 = vrot.lane.b32.xlu0 %v883, 109
        %v1210 = vpop.permute.xlu0 %1209
        %1211 = vrot.lane.b32.xlu0 %v886, 109
        %v1212 = vpop.permute.xlu0 %1211
        %1213 = vrot.lane.b32.xlu0 %v889, 109
        %v1214 = vpop.permute.xlu0 %1213
        %1215 = vrot.lane.b32.xlu0 %v881, 109
        %v1216 = vpop.permute.xlu0 %1215
        %1217 = vrot.lane.b32.xlu0 %v884, 109
        %v1218 = vpop.permute.xlu0 %1217
        %1219 = vrot.lane.b32.xlu0 %v887, 109
        %v1220 = vpop.permute.xlu0 %1219
        %1221 = vrot.lane.b32.xlu0 %v890, 109
        %v1222 = vpop.permute.xlu0 %1221
        %v1223 = vsel %vm591, %v1208, %v1216
        %v1224 = vsel %vm591, %v1210, %v1218
        %v1225 = vsel %vm591, %v1212, %v1220
        %v1226 = vsel %vm591, %v1214, %v1222
        %v1227 = vsel %vm591, %v1200, %v1208
        %v1228 = vsel %vm591, %v1202, %v1210
        %v1229 = vsel %vm591, %v1204, %v1212
        %v1230 = vsel %vm591, %v1206, %v1214
        %v1231 = vsel %vm591, %v1216, %v1200
        %v1232 = vsel %vm591, %v1218, %v1202
        %v1233 = vsel %vm591, %v1220, %v1204
        %v1234 = vsel %vm591, %v1222, %v1206
        %v1235 = vpack.c.bf16 %v1228, %v1227
        %v1236 = vpack.c.bf16 %v1224, %v1223
        %v1237 = vpack.c.bf16 %v1232, %v1231
        %v1238 = vpack.c.bf16 %v1230, %v1229
        %v1239 = vpack.c.bf16 %v1226, %v1225
        %v1240 = vpack.c.bf16 %v1234, %v1233
        %v1249 = vunpack.c.l.b16 %v891
        %v1250 = vunpack.c.h.b16 %v891
        %v1251 = vunpack.c.l.b16 %v892
        %v1252 = vunpack.c.l.b16 %v893
        %v1253 = vunpack.c.h.b16 %v893
        %v1254 = vunpack.c.l.b16 %v894
        %v1255 = vunpack.c.l.b16 %v895
        %v1256 = vunpack.c.h.b16 %v895
        %v1257 = vunpack.c.l.b16 %v896
        %v1258 = vunpack.c.l.b16 %v897
        %v1259 = vunpack.c.h.b16 %v897
        %v1260 = vunpack.c.l.b16 %v898
        %v1261 = vpack.c.b16 %v1252, %v1249
        %v1262 = vpack.c.b16 %v1253, %v1250
        %v1263 = vpack.c.b16 %v1254, %v1251
        %v1264 = vpack.c.b16 %v1258, %v1255
        %v1265 = vpack.c.b16 %v1259, %v1256
        %v1266 = vpack.c.b16 %v1260, %v1257
        %v1272 = vsel %vm640, %v1263, 0
        %v1275 = vsel %vm640, %v1266, 0
        %1277 = vmatprep.subr.bf16.mxu0 %v936
        %1278 = vmatpush1.bf16.msra.mxu0 %v935
        %1279 = vmatprep.subr.bf16.mxu0 %v939
        %1280 = vmatpush1.bf16.msra.mxu0 %v938
        %1281 = vmatprep.subr.bf16.mxu0 %v978
        %1282 = vmatpush1.bf16.msra.mxu0 %v977
        %1283 = vmatprep.subr.bf16.mxu0 %v981
        %1284 = vmatpush1.bf16.msra.mxu0 %v980
        %1285 = vmatprep.subr.bf16.mxu0 %v1020
        %1286 = vmatpush1.bf16.msra.mxu0 %v1019
        %1287 = vmatprep.subr.bf16.mxu0 %v1023
        %1288 = vmatpush1.bf16.msra.mxu0 %v1022
        %1289 = vmatprep.subr.bf16.mxu0 %v1062
        %1290 = vmatpush1.bf16.msra.mxu0 %v1061
        %1291 = vmatprep.subr.bf16.mxu0 %v1065
        %1292 = vmatpush1.bf16.msra.mxu0 %v1064
        %1293 = vmatprep.subr.bf16.mxu0 %v1068
        %1294 = vmatpush1.bf16.msra.mxu0 %v1067
        %1295 = vmatprep.subr.bf16.mxu0 %v1071
        %1296 = vmatpush1.bf16.msra.mxu0 %v1070
        %1297 = vmatprep.subr.bf16.mxu0 %v1110
        %1298 = vmatpush1.bf16.msra.mxu0 %v1109
        %1299 = vmatprep.subr.bf16.mxu0 %v1113
        %1300 = vmatpush1.bf16.msra.mxu0 %v1112
        %1301 = vmatprep.subr.bf16.mxu0 %v1152
        %1302 = vmatpush1.bf16.msra.mxu0 %v1151
        %1303 = vmatprep.subr.bf16.mxu0 %v1155
        %1304 = vmatpush1.bf16.msra.mxu0 %v1154
        %1305 = vmatprep.subr.bf16.mxu0 %v1194
        %1306 = vmatpush1.bf16.msra.mxu0 %v1193
        %1307 = vmatprep.subr.bf16.mxu0 %v1197
        %1308 = vmatpush1.bf16.msra.mxu0 %v1196
        %1309 = vmatprep.mubr.bf16.mxu0 %v1262
        %1310 = vmatmul.mubr.bf16.gmra.mrb[0].mxu0 %v1261
        %v1311 = vpop.f32.mrb[0].mxu0
        %v1312 = vadd.f32 %v237, %v1311
        %v1313 = vpop.f32.mrb[0].mxu0
        %v1314 = vadd.f32 %v238, %v1313
        %v1315 = vpop.f32.mrb[0].mxu0
        %v1316 = vadd.f32 %v240, %v1315
        %v1317 = vpop.f32.mrb[0].mxu0
        %v1318 = vadd.f32 %v241, %v1317
        %1319 = vmatprep.mubr.bf16.mxu0 %v1265
        %1320 = vmatmul.mubr.bf16.gmra.mrb[0].mxu0 %v1264
        %v1321 = vpop.f32.mrb[0].mxu0
        %v1322 = vadd.f32 %v243, %v1321
        %v1323 = vpop.f32.mrb[0].mxu0
        %v1324 = vadd.f32 %v244, %v1323
        %v1325 = vpop.f32.mrb[0].mxu0
        %v1326 = vadd.f32 %v246, %v1325
        %v1327 = vpop.f32.mrb[0].mxu0
        %v1328 = vadd.f32 %v247, %v1327
        %1329 = vdwg.mxu0
        %1330 = vmatprep.subr.bf16.mxu0 %v1236
        %1331 = vmatpush1.bf16.msra.mxu0 %v1235
        %1332 = vmatprep.subr.bf16.mxu0 %v1239
        %1333 = vmatpush1.bf16.msra.mxu0 %v1238
        %1334 = vmatprep.subr.bf16.mxu0 0
        %1335 = vmatpush1.bf16.msra.mxu0 0
        %1336 = vmatprep.subr.bf16.mxu0 0
        %1337 = vmatpush1.bf16.msra.mxu0 0
        %1338 = vmatprep.subr.bf16.mxu0 0
        %1339 = vmatpush1.bf16.msra.mxu0 0
        %1340 = vmatprep.subr.bf16.mxu0 0
        %1341 = vmatpush1.bf16.msra.mxu0 0
        %1342 = vmatprep.subr.bf16.mxu0 0
        %1343 = vmatpush1.bf16.msra.mxu0 0
        %1344 = vmatprep.subr.bf16.mxu0 0
        %1345 = vmatpush1.bf16.msra.mxu0 0
        %1346 = vmatprep.subr.bf16.mxu0 0
        %1347 = vmatpush1.bf16.msra.mxu0 0
        %1348 = vmatprep.subr.bf16.mxu0 0
        %1349 = vmatpush1.bf16.msra.mxu0 0
        %1350 = vmatprep.subr.bf16.mxu0 0
        %1351 = vmatpush1.bf16.msra.mxu0 0
        %1352 = vmatprep.subr.bf16.mxu0 0
        %1353 = vmatpush1.bf16.msra.mxu0 0
        %1354 = vmatprep.subr.bf16.mxu0 0
        %1355 = vmatpush1.bf16.msra.mxu0 0
        %1356 = vmatprep.subr.bf16.mxu0 0
        %1357 = vmatpush1.bf16.msra.mxu0 0
        %1358 = vmatprep.subr.bf16.mxu0 0
        %1359 = vmatpush1.bf16.msra.mxu0 0
        %1360 = vmatprep.subr.bf16.mxu0 0
        %1361 = vmatpush1.bf16.msra.mxu0 0
        %1362 = vmatprep.mubr.bf16.mxu0 0
        %1363 = vmatmul.mubr.bf16.gmra.mrb[0].mxu0 %v1272
        %v1364 = vpop.f32.mrb[0].mxu0
        %v1365 = vadd.f32 %v1312, %v1364
        %v1366 = vpop.f32.mrb[0].mxu0
        %v1367 = vadd.f32 %v1314, %v1366
        %v1368 = vpop.f32.mrb[0].mxu0
        %v1369 = vadd.f32 %v1316, %v1368
        %v1370 = vpop.f32.mrb[0].mxu0
        %v1371 = vadd.f32 %v1318, %v1370
        %1372 = vmatprep.mubr.bf16.mxu0 0
        %1373 = vmatmul.mubr.bf16.gmra.mrb[0].mxu0 %v1275
        %v1374 = vpop.f32.mrb[0].mxu0
        %v1375 = vadd.f32 %v1322, %v1374
        %v1376 = vpop.f32.mrb[0].mxu0
        %v1377 = vadd.f32 %v1324, %v1376
        %v1378 = vpop.f32.mrb[0].mxu0
        %v1379 = vadd.f32 %v1326, %v1378
        %v1380 = vpop.f32.mrb[0].mxu0
        %v1381 = vadd.f32 %v1328, %v1380
        %1382 = vdwg.mxu0
        %1383 = vmatprep.subr.bf16.mxu0 0
        %1384 = vmatpush1.bf16.msra.mxu0 %v937
        %1385 = vmatprep.subr.bf16.mxu0 0
        %1386 = vmatpush1.bf16.msra.mxu0 %v940
        %1387 = vmatprep.subr.bf16.mxu0 0
        %1388 = vmatpush1.bf16.msra.mxu0 %v979
        %1389 = vmatprep.subr.bf16.mxu0 0
        %1390 = vmatpush1.bf16.msra.mxu0 %v982
        %1391 = vmatprep.subr.bf16.mxu0 0
        %1392 = vmatpush1.bf16.msra.mxu0 %v1021
        %1393 = vmatprep.subr.bf16.mxu0 0
        %1394 = vmatpush1.bf16.msra.mxu0 %v1024
        %1395 = vmatprep.subr.bf16.mxu0 0
        %1396 = vmatpush1.bf16.msra.mxu0 %v1063
        %1397 = vmatprep.subr.bf16.mxu0 0
        %1398 = vmatpush1.bf16.msra.mxu0 %v1066
        %1399 = vmatprep.subr.bf16.mxu0 0
        %1400 = vmatpush1.bf16.msra.mxu0 %v1069
        %1401 = vmatprep.subr.bf16.mxu0 0
        %1402 = vmatpush1.bf16.msra.mxu0 %v1072
        %1403 = vmatprep.subr.bf16.mxu0 0
        %1404 = vmatpush1.bf16.msra.mxu0 %v1111
        %1405 = vmatprep.subr.bf16.mxu0 0
        %1406 = vmatpush1.bf16.msra.mxu0 %v1114
        %1407 = vmatprep.subr.bf16.mxu0 0
        %1408 = vmatpush1.bf16.msra.mxu0 %v1153
        %1409 = vmatprep.subr.bf16.mxu0 0
        %1410 = vmatpush1.bf16.msra.mxu0 %v1156
        %1411 = vmatprep.subr.bf16.mxu0 0
        %1412 = vmatpush1.bf16.msra.mxu0 %v1195
        %1413 = vmatprep.subr.bf16.mxu0 0
        %1414 = vmatpush1.bf16.msra.mxu0 %v1198
        %1415 = vmatprep.mubr.bf16.mxu0 %v1262
        %1416 = vmatmul.mubr.bf16.gmra.mrb[0].mxu0 %v1261
        %v1417 = vpop.f32.mrb[0].mxu0
        %v1418 = vadd.f32 %v239, %v1417
        %v1419 = vpop.f32.mrb[0].mxu0
        %v1420 = vpop.f32.mrb[0].mxu0
        %v1421 = vadd.f32 %v242, %v1420
        %v1422 = vpop.f32.mrb[0].mxu0
        %1423 = vmatprep.mubr.bf16.mxu0 %v1265
        %1424 = vmatmul.mubr.bf16.gmra.mrb[0].mxu0 %v1264
        %v1425 = vpop.f32.mrb[0].mxu0
        %v1426 = vadd.f32 %v245, %v1425
        %v1427 = vpop.f32.mrb[0].mxu0
        %v1428 = vpop.f32.mrb[0].mxu0
        %v1429 = vadd.f32 %v248, %v1428
        %v1430 = vpop.f32.mrb[0].mxu0
        %1431 = vdwg.mxu0
        %1432 = vmatprep.subr.bf16.mxu0 0
        %1433 = vmatpush1.bf16.msra.mxu0 %v1237
        %1434 = vmatprep.subr.bf16.mxu0 0
        %1435 = vmatpush1.bf16.msra.mxu0 %v1240
        %1436 = vmatprep.subr.bf16.mxu0 0
        %1437 = vmatpush1.bf16.msra.mxu0 0
        %1438 = vmatprep.subr.bf16.mxu0 0
        %1439 = vmatpush1.bf16.msra.mxu0 0
        %1440 = vmatprep.subr.bf16.mxu0 0
        %1441 = vmatpush1.bf16.msra.mxu0 0
        %1442 = vmatprep.subr.bf16.mxu0 0
        %1443 = vmatpush1.bf16.msra.mxu0 0
        %1444 = vmatprep.subr.bf16.mxu0 0
        %1445 = vmatpush1.bf16.msra.mxu0 0
        %1446 = vmatprep.subr.bf16.mxu0 0
        %1447 = vmatpush1.bf16.msra.mxu0 0
        %1448 = vmatprep.subr.bf16.mxu0 0
        %1449 = vmatpush1.bf16.msra.mxu0 0
        %1450 = vmatprep.subr.bf16.mxu0 0
        %1451 = vmatpush1.bf16.msra.mxu0 0
        %1452 = vmatprep.subr.bf16.mxu0 0
        %1453 = vmatpush1.bf16.msra.mxu0 0
        %1454 = vmatprep.subr.bf16.mxu0 0
        %1455 = vmatpush1.bf16.msra.mxu0 0
        %1456 = vmatprep.subr.bf16.mxu0 0
        %1457 = vmatpush1.bf16.msra.mxu0 0
        %1458 = vmatprep.subr.bf16.mxu0 0
        %1459 = vmatpush1.bf16.msra.mxu0 0
        %1460 = vmatprep.subr.bf16.mxu0 0
        %1461 = vmatpush1.bf16.msra.mxu0 0
        %1462 = vmatprep.subr.bf16.mxu0 0
        %1463 = vmatpush1.bf16.msra.mxu0 0
        %1464 = vmatprep.mubr.bf16.mxu0 0
        %1465 = vmatmul.mubr.bf16.gmra.mrb[0].mxu0 %v1272
        %v1466 = vpop.f32.mrb[0].mxu0
        %v1467 = vadd.f32 %v1418, %v1466
        %v1468 = vpop.f32.mrb[0].mxu0
        %v1469 = vpop.f32.mrb[0].mxu0
        %v1470 = vadd.f32 %v1421, %v1469
        %v1471 = vpop.f32.mrb[0].mxu0
        %1472 = vmatprep.mubr.bf16.mxu0 0
        %1473 = vmatmul.mubr.bf16.gmra.mrb[0].mxu0 %v1275
        %v1474 = vpop.f32.mrb[0].mxu0
        %v1475 = vadd.f32 %v1426, %v1474
        %v1476 = vpop.f32.mrb[0].mxu0
        %v1477 = vpop.f32.mrb[0].mxu0
        %v1478 = vadd.f32 %v1429, %v1477
        %v1479 = vpop.f32.mrb[0].mxu0
        %1480 = vdwg.mxu0
        %v1481 = vmax.f32 %v1365, 0.0
        %v1482 = vmax.f32 %v1367, 0.0
        %v1483 = vmax.f32 %v1467, 0.0
        %v1484 = vmax.f32 %v1369, 0.0
        %v1485 = vmax.f32 %v1371, 0.0
        %v1486 = vmax.f32 %v1470, 0.0
        %v1487 = vmax.f32 %v1375, 0.0
        %v1488 = vmax.f32 %v1377, 0.0
        %v1489 = vmax.f32 %v1475, 0.0
        %v1490 = vmax.f32 %v1379, 0.0
        %v1491 = vmax.f32 %v1381, 0.0
        %v1492 = vmax.f32 %v1478, 0.0
        %1493 = vst [vmem:[%s233] sm:$0xff] %v1481
        %1494 = vst [vmem:[%s233 + $0x8] sm:$0xff] %v1482
        %1495 = vst [vmem:[%s233 + $0x10] sm:$0xff] %v1483
        %1496 = vst [vmem:[%s233 + $0x18] sm:$0xff] %v1484
        %1497 = vst [vmem:[%s233 + $0x20] sm:$0xff] %v1485
        %1498 = vst [vmem:[%s233 + $0x28] sm:$0xff] %v1486
        %1499 = vst [vmem:[%s233 + $0x30] sm:$0xff] %v1487
        %1500 = vst [vmem:[%s233 + $0x38] sm:$0xff] %v1488
        %1501 = vst [vmem:[%s233 + $0x40] sm:$0xff] %v1489
        %1502 = vst [vmem:[%s233 + $0x48] sm:$0xff] %v1490
        %1503 = vst [vmem:[%s233 + $0x50] sm:$0xff] %v1491
        %1504 = vst [vmem:[%s233 + $0x58] sm:$0xff] %v1492
        %s1505 = sand.u32 %s112, 1
        %s1506 = sand.u32 %s112, 1
        %s1507 = smul.addr %s1506, 96
        %s1508 = scalar_lea.vmem [#allocation3], %s1507
        // Predicated region
        $region60: #{resblock_forward.1} parent=54 // pred_check
          %p1509 = pneg %p122
        $region61: #{resblock_forward.1} parent=54 // pred_check_branch
          %1511 = sbr.rel (%p1509) target = $region63
        $region62: #{resblock_forward.1} parent=54 // pred_region
          %s1512 = smul.u32 3, %s15
          %s1513 = smul.addr %s1512, 8
          %s1514 = scalar_lea.vmem %s4, %s1513
          // Predicated region
          $region64: #{resblock_forward.1} parent=62 // pred_check
            _
          $region65: #{resblock_forward.1} parent=62 // pred_check_branch
            %1516 = sbr.rel (0) target = $region67
          $region66: #{resblock_forward.1} parent=62 // pred_region
            // Predicated region
            $region68: #{resblock_forward.1} parent=66 // pred_check
              _
            $region69: #{resblock_forward.1} parent=66 // pred_check_branch
              %1518 = sbr.rel (0) target = $region71
            $region70: #{resblock_forward.1} parent=66 // pred_region
              loop: start=0, step=1, limit=1
              $region72: #{resblock_forward.1} parent=70 // loop_pre_header
                _
              $region73: #{resblock_forward.1} parent=70 // loop_header
                %s1520 = sphi 0, %s1524
                %p1521 = scmp.ge.s32.totalorder %s1520, 1
                %s1525 = sphi %s1508, %s1508
                %s1526 = sphi %s1514, %s1514
              $region74: #{resblock_forward.1} parent=70 // loop_header_branch
                %1523 = sbr.rel (%p1521) target = $region78
              $region75: #{resblock_forward.1} parent=70 // loop_body
                %v1527 = vld [vmem:[%s1525] sm:$0xff]
                %1528 = vst [vmem:[%s1526] sm:$0xff] %v1527
                %v1529 = vld [vmem:[%s1525 + $0x8] sm:$0xff]
                %1530 = vst [vmem:[%s1526 + $0x8] sm:$0xff] %v1529
                %v1531 = vld [vmem:[%s1525 + $0x10] sm:$0xff]
                %1532 = vst [vmem:[%s1526 + $0x10] sm:$0xff] %v1531
                %v1533 = vld [vmem:[%s1525 + $0x18] sm:$0xff]
                %1534 = vst [vmem:[%s1526 + $0x30] sm:$0xff] %v1533
                %v1535 = vld [vmem:[%s1525 + $0x20] sm:$0xff]
                %1536 = vst [vmem:[%s1526 + $0x38] sm:$0xff] %v1535
                %v1537 = vld [vmem:[%s1525 + $0x28] sm:$0xff]
                %1538 = vst [vmem:[%s1526 + $0x40] sm:$0xff] %v1537
                %v1539 = vld [vmem:[%s1525 + $0x30] sm:$0xff]
                %1540 = vst [vmem:[%s1526 + $0x60] sm:$0xff] %v1539
                %v1541 = vld [vmem:[%s1525 + $0x38] sm:$0xff]
                %1542 = vst [vmem:[%s1526 + $0x68] sm:$0xff] %v1541
                %v1543 = vld [vmem:[%s1525 + $0x40] sm:$0xff]
                %1544 = vst [vmem:[%s1526 + $0x70] sm:$0xff] %v1543
                %v1545 = vld [vmem:[%s1525 + $0x48] sm:$0xff]
                %1546 = vst [vmem:[%s1526 + $0x90] sm:$0xff] %v1545
                %v1547 = vld [vmem:[%s1525 + $0x50] sm:$0xff]
                %1548 = vst [vmem:[%s1526 + $0x98] sm:$0xff] %v1547
                %v1549 = vld [vmem:[%s1525 + $0x58] sm:$0xff]
                %1550 = vst [vmem:[%s1526 + $0xa0] sm:$0xff] %v1549
              $region76: #{resblock_forward.1} parent=70 // loop_footer
                %s1524 = sadd.s32 1, %s1520
              $region77: #{resblock_forward.1} parent=70 // loop_footer_branch
                %1519 = sbr.rel target = $region73
              $region78: #{resblock_forward.1} parent=70 // loop_exit
                _
            $region71: #{resblock_forward.1} parent=66 // pred_fallthru
              _
            // Predicated region
            $region79: #{resblock_forward.1} parent=66 // pred_check
              _
            $region80: #{resblock_forward.1} parent=66 // pred_check_branch
              %1552 = sbr.rel target = $region82
            $region81: #{resblock_forward.1} parent=66 // pred_region
              _
            $region82: #{resblock_forward.1} parent=66 // pred_fallthru
              _
          $region67: #{resblock_forward.1} parent=62 // pred_fallthru
            _
          %1553 = vnop
        $region63: #{resblock_forward.1} parent=54 // pred_fallthru
          _
      $region55: #{resblock_forward.1} parent=5 // pred_fallthru
        _
      %p1554 = scmp.le.s32.totalorder 2, %s10
      // Predicated region
      $region83: #{resblock_forward.1} parent=5 // pred_check
        %p1555 = pneg %p1554
      $region84: #{resblock_forward.1} parent=5 // pred_check_branch
        %1557 = sbr.rel (%p1555) target = $region86
      $region85: #{resblock_forward.1} parent=5 // pred_region
        %s1558 = ssub.s32 %s10, 2
        // Predicated region
        $region87: #{resblock_forward.1} parent=85 // pred_check
          %p1559 = pneg %p128
        $region88: #{resblock_forward.1} parent=85 // pred_check_branch
          %1561 = sbr.rel (%p1559) target = $region90
        $region89: #{resblock_forward.1} parent=85 // pred_region
          %s1562 = sand.u32 %s113, 1
          %s1563 = sand.u32 %s113, 1
          %s1564 = smul.addr %s1563, 96
          %s1565 = scalar_lea.vmem [#allocation3], %s1564
        $region90: #{resblock_forward.1} parent=85 // pred_fallthru
          _
      $region86: #{resblock_forward.1} parent=5 // pred_fallthru
        _
    $region6: #{resblock_forward.1} parent=1 // loop_footer
      %s14 = sadd.s32 1, %s10
    $region7: #{resblock_forward.1} parent=1 // loop_footer_branch
      %9 = sbr.rel target = $region3
    $region8: #{resblock_forward.1} parent=1 // loop_exit
      _

</llo_original>
